<compile_context>
chip_gen: v5e
topology: v5e:2x2
jax: 0.10.0
libtpu: 0.0.40
codegen_flags: <defaults>
</compile_context>

<pallas_src>
import functools

import jax
import jax.numpy as jnp
from jax.experimental import pallas as pl
from jax.experimental.pallas import tpu as pltpu

EPS = 1e-5
LANE = 128
VMEM_LIMIT = 32 * 1024 * 1024  # safe on v5e/v6e/v7x


def _round_up(x, m):
    return ((x + m - 1) // m) * m


def _pad2(a, rows, cols):
    r, c = a.shape
    return jnp.pad(a, ((0, rows - r), (0, cols - c)))


# ---------------------------------------------------------------------------
# Kernel 1: fused (BN-apply + ReLU) + feature transform:  out = act(h*s + t) @ W
# ---------------------------------------------------------------------------
def _transform_kernel(h_ref, scale_ref, shift_ref, w_ref, o_ref, *, relu):
    h = h_ref[...] * scale_ref[...] + shift_ref[...]      # f32 VPU
    if relu:
        h = jnp.maximum(h, 0.0)
    o_ref[...] = jnp.dot(h.astype(jnp.bfloat16), w_ref[...],
                         preferred_element_type=jnp.float32).astype(o_ref.dtype)


def _transform(h, scale, shift, w_bf16, *, relu, tile):
    n_pad, f_in = h.shape
    f_out = w_bf16.shape[1]
    return pl.pallas_call(
        functools.partial(_transform_kernel, relu=relu),
        out_shape=jax.ShapeDtypeStruct((n_pad, f_out), jnp.bfloat16),
        grid_spec=pltpu.PrefetchScalarGridSpec(
            num_scalar_prefetch=0,
            grid=(n_pad // tile,),
            in_specs=[
                pl.BlockSpec((tile, f_in), lambda i: (i, 0)),
                pl.BlockSpec((1, f_in), lambda i: (0, 0)),
                pl.BlockSpec((1, f_in), lambda i: (0, 0)),
                pl.BlockSpec((f_in, f_out), lambda i: (0, 0)),
            ],
            out_specs=pl.BlockSpec((tile, f_out), lambda i: (i, 0)),
        ),
        compiler_params=pltpu.CompilerParams(
            dimension_semantics=("parallel",),
            vmem_limit_bytes=VMEM_LIMIT),
    )(h, scale, shift, w_bf16)


# ---------------------------------------------------------------------------
# Kernel 2: tiled aggregation  y = A_hat @ HW + b   (+ one-pass masked BN stats)
# grid = (row_tiles [parallel], col/reduction_tiles [arbitrary])
# ---------------------------------------------------------------------------
def _aggregate_kernel(a_ref, hw_ref, b_ref, mask_ref, y_ref, psum_ref, psumsq_ref):
    k = pl.program_id(1)

    @pl.when(k == 0)
    def _():
        y_ref[...] = jnp.zeros_like(y_ref)

    # bf16 x bf16 -> f32 accumulate directly in the resident output block
    y_ref[...] += jnp.dot(a_ref[...], hw_ref[...],
                          preferred_element_type=jnp.float32)

    @pl.when(k == pl.num_programs(1) - 1)
    def _():
        y = y_ref[...] + b_ref[...]
        y_ref[...] = y
        # one-pass BN statistics over the (masked) valid rows of this tile
        ym = y * mask_ref[...]                              # zero padded rows
        s = jnp.sum(ym, axis=0, keepdims=True)              # (1, F)
        sq = jnp.sum(ym * y, axis=0, keepdims=True)         # (1, F), mask*y^2
        psum_ref[...] = jnp.broadcast_to(s[:, None, :], psum_ref.shape)
        psumsq_ref[...] = jnp.broadcast_to(sq[:, None, :], psumsq_ref.shape)


def _aggregate(a_bf16, hw_bf16, bias, row_mask, *, tile):
    n_pad = a_bf16.shape[0]
    f = hw_bf16.shape[1]
    nr = n_pad // tile
    nk = n_pad // tile
    return pl.pallas_call(
        _aggregate_kernel,
        out_shape=(
            jax.ShapeDtypeStruct((n_pad, f), jnp.float32),   # y
            jax.ShapeDtypeStruct((nr, 8, f), jnp.float32),   # per-tile sum
            jax.ShapeDtypeStruct((nr, 8, f), jnp.float32),   # per-tile sum of squares
        ),
        grid_spec=pltpu.PrefetchScalarGridSpec(
            num_scalar_prefetch=0,
            grid=(nr, nk),
            in_specs=[
                pl.BlockSpec((tile, tile), lambda i, k: (i, k)),  # A_hat tile (bf16)
                pl.BlockSpec((tile, f), lambda i, k: (k, 0)),     # HW k-tile (bf16)
                pl.BlockSpec((1, f), lambda i, k: (0, 0)),        # bias
                pl.BlockSpec((tile, 1), lambda i, k: (i, 0)),     # valid-row mask
            ],
            out_specs=(
                pl.BlockSpec((tile, f), lambda i, k: (i, 0)),
                pl.BlockSpec((1, 8, f), lambda i, k: (i, 0, 0)),
                pl.BlockSpec((1, 8, f), lambda i, k: (i, 0, 0)),
            ),
        ),
        compiler_params=pltpu.CompilerParams(
            dimension_semantics=("parallel", "arbitrary"),
            vmem_limit_bytes=VMEM_LIMIT),
    )(a_bf16, hw_bf16, bias, row_mask)


# ---------------------------------------------------------------------------
# Kernel 3: final BN apply (affine), lane-dense
# ---------------------------------------------------------------------------
def _affine_kernel(y_ref, scale_ref, shift_ref, o_ref):
    o_ref[...] = y_ref[...] * scale_ref[...] + shift_ref[...]


def _affine(y, scale, shift, *, tile):
    n_pad, f = y.shape
    return pl.pallas_call(
        _affine_kernel,
        out_shape=jax.ShapeDtypeStruct((n_pad, f), jnp.float32),
        grid_spec=pltpu.PrefetchScalarGridSpec(
            num_scalar_prefetch=0,
            grid=(n_pad // tile,),
            in_specs=[
                pl.BlockSpec((tile, f), lambda i: (i, 0)),
                pl.BlockSpec((1, f), lambda i: (0, 0)),
                pl.BlockSpec((1, f), lambda i: (0, 0)),
            ],
            out_specs=pl.BlockSpec((tile, f), lambda i: (i, 0)),
        ),
        compiler_params=pltpu.CompilerParams(
            dimension_semantics=("parallel",),
            vmem_limit_bytes=VMEM_LIMIT),
    )(y, scale, shift)


# ---------------------------------------------------------------------------
# Full forward
# ---------------------------------------------------------------------------
def gcn_encoder(a_hat, x, params, *, tile=128):
    """Forward pass of GCNEncoder.  a_hat: [N,N] f32, x: [N,F_in] f32."""
    n, f_in = x.shape
    hid = params["w1"].shape[1]
    out_c = params["w2"].shape[1]

    n_pad = _round_up(max(n, tile), tile)
    f_in_p = _round_up(f_in, LANE)
    hid_p = _round_up(hid, LANE)
    out_p = _round_up(out_c, LANE)

    # Pad everything to lane-dense shapes; cast matmul operands to bf16.
    x_p = _pad2(x, n_pad, f_in_p)
    a_p = _pad2(a_hat, n_pad, n_pad).astype(jnp.bfloat16)

    w1 = _pad2(params["w1"], f_in_p, hid_p).astype(jnp.bfloat16)
    b1 = _pad2(params["b1"], 1, hid_p)
    g1 = _pad2(params["g1"], 1, hid_p)
    be1 = _pad2(params["be1"], 1, hid_p)
    w2 = _pad2(params["w2"], hid_p, out_p).astype(jnp.bfloat16)
    b2 = _pad2(params["b2"], 1, out_p)
    g2 = _pad2(params["g2"], 1, out_p)
    be2 = _pad2(params["be2"], 1, out_p)

    row_mask = (jnp.arange(n_pad) < n).astype(jnp.float32)[:, None]   # [N_pad, 1]

    # ---- layer 1: XW1, then tiled A_hat aggregation (+ one-pass BN stats) ----
    ones_s = jnp.ones((1, f_in_p), jnp.float32)
    zeros_s = jnp.zeros((1, f_in_p), jnp.float32)
    xw1 = _transform(x_p, ones_s, zeros_s, w1, relu=False, tile=tile)
    y1, ps1, psq1 = _aggregate(a_p, xw1, b1, row_mask, tile=tile)

    # finalize BN1 stats (tiny: num_tiles x 128) and fold into scale/shift
    s1 = jnp.sum(ps1[:, 0, :], axis=0)
    sq1 = jnp.sum(psq1[:, 0, :], axis=0)
    mean1 = s1 / n
    var1 = jnp.maximum(sq1 / n - mean1 * mean1, 0.0)      # biased (training-mode)
    inv1 = jax.lax.rsqrt(var1 + EPS)
    scale1 = g1 * inv1
    shift1 = be1 - mean1 * scale1

    # ---- layer 2: fused BN1-apply + ReLU + W2, then tiled aggregation ----
    hw2 = _transform(y1, scale1, shift1, w2, relu=True, tile=tile)
    y2, ps2, psq2 = _aggregate(a_p, hw2, b2, row_mask, tile=tile)

    s2 = jnp.sum(ps2[:, 0, :], axis=0)
    sq2 = jnp.sum(psq2[:, 0, :], axis=0)
    mean2 = s2 / n
    var2 = jnp.maximum(sq2 / n - mean2 * mean2, 0.0)
    inv2 = jax.lax.rsqrt(var2 + EPS)
    scale2 = g2 * inv2
    shift2 = be2 - mean2 * scale2

    z_pad = _affine(y2, scale2, shift2, tile=tile)
    return z_pad[:n, :out_c]


# ---------------------------------------------------------------------------
# Plain-JAX glue: normalized adjacency (matches PyG gcn_norm semantics)
# ---------------------------------------------------------------------------
def build_normalized_adjacency(edge_index, num_nodes):
    src, dst = edge_index[0], edge_index[1]
    adj = jnp.zeros((num_nodes, num_nodes), jnp.float32)
    adj = adj.at[dst, src].add(1.0)                 # scatter-add (duplicates sum)
    eye = jnp.eye(num_nodes, dtype=jnp.float32)
    adj = adj * (1.0 - eye) + eye                   # exactly one self-loop per node
    deg = jnp.sum(adj, axis=1)
    dinv = jnp.where(deg > 0, jax.lax.rsqrt(deg), 0.0)
    return adj * dinv[:, None] * dinv[None, :]


def init_params(key, in_channels, hidden_channels, out_channels):
    k1, k2 = jax.random.split(key, 2)

    def glorot(k, fan_in, fan_out):
        scale = jnp.sqrt(6.0 / (fan_in + fan_out))
        return jax.random.uniform(k, (fan_in, fan_out), jnp.float32, -scale, scale)

    return {
        "w1": glorot(k1, in_channels, hidden_channels),
        "b1": jnp.zeros((1, hidden_channels), jnp.float32),
        "g1": jnp.ones((1, hidden_channels), jnp.float32),
        "be1": jnp.zeros((1, hidden_channels), jnp.float32),
        "w2": glorot(k2, hidden_channels, out_channels),
        "b2": jnp.zeros((1, out_channels), jnp.float32),
        "g2": jnp.ones((1, out_channels), jnp.float32),
        "be2": jnp.zeros((1, out_channels), jnp.float32),
    }


if __name__ == "__main__":
    # Small deterministic example: 300 nodes (exercises row/col tiling, padding
    # and the valid-row mask), in=10, hidden=50, out=32 as in the pipeline.
    N, IN_C, HID_C, OUT_C = 300, 10, 50, 32
    key = jax.random.PRNGKey(0)
    kx, ke, kp = jax.random.split(key, 3)

    x = jax.random.normal(kx, (N, IN_C), dtype=jnp.float32)

    num_edges = 600
    src = jax.random.randint(ke, (num_edges,), 0, N)
    dst = jax.random.randint(jax.random.fold_in(ke, 1), (num_edges,), 0, N)
    edge_index = jnp.stack([jnp.concatenate([src, dst]),
                            jnp.concatenate([dst, src])], axis=0)

    a_hat = build_normalized_adjacency(edge_index, N)
    params = init_params(kp, IN_C, HID_C, OUT_C)

    encoder = jax.jit(functools.partial(gcn_encoder, tile=128))
    z = encoder(a_hat, x, params)
    jax.block_until_ready(z)

    assert z.shape == (N, OUT_C)
    assert bool(jnp.all(jnp.isfinite(z)))
    print("KERNEL_OK")
</pallas_src>

<mosaic_0001>
module attributes {stable_mosaic.version = 11 : i64} {
  func.func @_transform_kernel(%arg0: i32, %arg1: memref<128x128xf32, #tpu.memory_space<vmem>>, %arg2: memref<1x128xf32, #tpu.memory_space<vmem>>, %arg3: memref<1x128xf32, #tpu.memory_space<vmem>>, %arg4: memref<128x128xbf16, #tpu.memory_space<vmem>>, %arg5: memref<128x128xbf16, #tpu.memory_space<vmem>>) attributes {dimension_semantics = [#tpu.dimension_semantics<parallel>], iteration_bounds = array<i64: 3>, scalar_prefetch = 0 : i64, scratch_operands = 0 : i64, tpu.core_type = #tpu.core_type<tc>, window_params = [{transform_indices = @transform_0, window_bounds = array<i64: 128, 128>}, {pipeline_mode = #tpu.pipeline_mode<synchronous>, transform_indices = @transform_1, window_bounds = array<i64: 1, 128>}, {pipeline_mode = #tpu.pipeline_mode<synchronous>, transform_indices = @transform_2, window_bounds = array<i64: 1, 128>}, {pipeline_mode = #tpu.pipeline_mode<synchronous>, transform_indices = @transform_3, window_bounds = array<i64: 128, 128>}, {transform_indices = @transform_4, window_bounds = array<i64: 128, 128>}]} {
    %c0 = arith.constant 0 : index
    %c0_0 = arith.constant 0 : index
    %0 = vector.load %arg1[%c0, %c0_0] : memref<128x128xf32, #tpu.memory_space<vmem>>, vector<128x128xf32>
    %c0_1 = arith.constant 0 : index
    %c0_2 = arith.constant 0 : index
    %1 = vector.load %arg2[%c0_1, %c0_2] : memref<1x128xf32, #tpu.memory_space<vmem>>, vector<1x128xf32>
    %2 = vector.broadcast %1 : vector<1x128xf32> to vector<128x128xf32>
    %3 = arith.mulf %0, %2 : vector<128x128xf32>
    %c0_3 = arith.constant 0 : index
    %c0_4 = arith.constant 0 : index
    %4 = vector.load %arg3[%c0_3, %c0_4] : memref<1x128xf32, #tpu.memory_space<vmem>>, vector<1x128xf32>
    %5 = vector.broadcast %4 : vector<1x128xf32> to vector<128x128xf32>
    %6 = arith.addf %3, %5 : vector<128x128xf32>
    %7 = arith.truncf %6 : vector<128x128xf32> to vector<128x128xbf16>
    %c0_5 = arith.constant 0 : index
    %c0_6 = arith.constant 0 : index
    %8 = vector.load %arg4[%c0_5, %c0_6] : memref<128x128xbf16, #tpu.memory_space<vmem>>, vector<128x128xbf16>
    %cst = arith.constant dense<0.000000e+00> : vector<128x128xf32>
    %9 = tpu.matmul %7, %8, %cst {dimension_numbers = #tpu.dot_dimension_numbers<[1], [0], [0], [1], [0, 0, 1, 1], [], []>} : vector<128x128xbf16>, vector<128x128xbf16>, vector<128x128xf32> -> vector<128x128xf32>
    %10 = arith.truncf %9 : vector<128x128xf32> to vector<128x128xbf16>
    %c0_7 = arith.constant 0 : index
    %c0_8 = arith.constant 0 : index
    %11 = vector.load %arg5[%c0_7, %c0_8] : memref<128x128xbf16, #tpu.memory_space<vmem>>, vector<128x128xbf16>
    tpu.vector_store %arg5[%c0_7, %c0_8], %10 {strides = array<i32>} : memref<128x128xbf16, #tpu.memory_space<vmem>>, vector<128x128xbf16>,
    return
  }
  func.func @transform_0(%arg0: i32) -> (i32, i32) {
    %c0_i32 = arith.constant 0 : i32
    %c0_i32_0 = arith.constant 0 : i32
    return %arg0, %c0_i32 : i32, i32
  }
  func.func @transform_1(%arg0: i32) -> (i32, i32) {
    %c0_i32 = arith.constant 0 : i32
    %c0_i32_0 = arith.constant 0 : i32
    %c0_i32_1 = arith.constant 0 : i32
    return %c0_i32, %c0_i32_0 : i32, i32
  }
  func.func @transform_2(%arg0: i32) -> (i32, i32) {
    %c0_i32 = arith.constant 0 : i32
    %c0_i32_0 = arith.constant 0 : i32
    %c0_i32_1 = arith.constant 0 : i32
    return %c0_i32, %c0_i32_0 : i32, i32
  }
  func.func @transform_3(%arg0: i32) -> (i32, i32) {
    %c0_i32 = arith.constant 0 : i32
    %c0_i32_0 = arith.constant 0 : i32
    %c0_i32_1 = arith.constant 0 : i32
    return %c0_i32, %c0_i32_0 : i32, i32
  }
  func.func @transform_4(%arg0: i32) -> (i32, i32) {
    %c0_i32 = arith.constant 0 : i32
    %c0_i32_0 = arith.constant 0 : i32
    return %arg0, %c0_i32 : i32, i32
  }
}

module attributes {stable_mosaic.version = 11 : i64} {
  func.func @_aggregate_kernel(%arg0: i32, %arg1: i32, %arg2: memref<128x128xbf16, #tpu.memory_space<vmem>>, %arg3: memref<128x128xbf16, #tpu.memory_space<vmem>>, %arg4: memref<1x128xf32, #tpu.memory_space<vmem>>, %arg5: memref<128x1xf32, #tpu.memory_space<vmem>>, %arg6: memref<128x128xf32, #tpu.memory_space<vmem>>, %arg7: memref<1x8x128xf32, #tpu.memory_space<vmem>>, %arg8: memref<1x8x128xf32, #tpu.memory_space<vmem>>) attributes {dimension_semantics = [#tpu.dimension_semantics<parallel>, #tpu.dimension_semantics<arbitrary>], iteration_bounds = array<i64: 3, 3>, scalar_prefetch = 0 : i64, scratch_operands = 0 : i64, tpu.core_type = #tpu.core_type<tc>, window_params = [{transform_indices = @transform_0, window_bounds = array<i64: 128, 128>}, {transform_indices = @transform_1, window_bounds = array<i64: 128, 128>}, {pipeline_mode = #tpu.pipeline_mode<synchronous>, transform_indices = @transform_2, window_bounds = array<i64: 1, 128>}, {transform_indices = @transform_3, window_bounds = array<i64: 128, 1>}, {transform_indices = @transform_4, window_bounds = array<i64: 128, 128>}, {transform_indices = @transform_5, window_bounds = array<i64: 1, 8, 128>}, {transform_indices = @transform_6, window_bounds = array<i64: 1, 8, 128>}]} {
    %c0_i32 = arith.constant 0 : i32
    %0 = arith.cmpi eq, %arg1, %c0_i32 : i32
    %1 = arith.extui %0 : i1 to i32
    %c0_i32_0 = arith.constant 0 : i32
    %2 = arith.cmpi ne, %1, %c0_i32_0 : i32
    scf.if %2 {
      %cst_9 = arith.constant 0.000000e+00 : f32
      %12 = vector.broadcast %cst_9 : f32 to vector<128x128xf32>
      %c0_10 = arith.constant 0 : index
      %c0_11 = arith.constant 0 : index
      %13 = vector.load %arg6[%c0_10, %c0_11] : memref<128x128xf32, #tpu.memory_space<vmem>>, vector<128x128xf32>
      tpu.vector_store %arg6[%c0_10, %c0_11], %12 {strides = array<i32>} : memref<128x128xf32, #tpu.memory_space<vmem>>, vector<128x128xf32>,
    } else {
    }
    %c0 = arith.constant 0 : index
    %c0_1 = arith.constant 0 : index
    %3 = vector.load %arg6[%c0, %c0_1] : memref<128x128xf32, #tpu.memory_space<vmem>>, vector<128x128xf32>
    %c0_2 = arith.constant 0 : index
    %c0_3 = arith.constant 0 : index
    %4 = vector.load %arg2[%c0_2, %c0_3] : memref<128x128xbf16, #tpu.memory_space<vmem>>, vector<128x128xbf16>
    %c0_4 = arith.constant 0 : index
    %c0_5 = arith.constant 0 : index
    %5 = vector.load %arg3[%c0_4, %c0_5] : memref<128x128xbf16, #tpu.memory_space<vmem>>, vector<128x128xbf16>
    %cst = arith.constant dense<0.000000e+00> : vector<128x128xf32>
    %6 = tpu.matmul %4, %5, %cst {dimension_numbers = #tpu.dot_dimension_numbers<[1], [0], [0], [1], [0, 0, 1, 1], [], []>} : vector<128x128xbf16>, vector<128x128xbf16>, vector<128x128xf32> -> vector<128x128xf32>
    %7 = arith.addf %3, %6 : vector<128x128xf32>
    %c0_6 = arith.constant 0 : index
    %c0_7 = arith.constant 0 : index
    %8 = vector.load %arg6[%c0_6, %c0_7] : memref<128x128xf32, #tpu.memory_space<vmem>>, vector<128x128xf32>
    tpu.vector_store %arg6[%c0_6, %c0_7], %7 {strides = array<i32>} : memref<128x128xf32, #tpu.memory_space<vmem>>, vector<128x128xf32>,
    %c2_i32 = arith.constant 2 : i32
    %9 = arith.cmpi eq, %arg1, %c2_i32 : i32
    %10 = arith.extui %9 : i1 to i32
    %c0_i32_8 = arith.constant 0 : i32
    %11 = arith.cmpi ne, %10, %c0_i32_8 : i32
    scf.if %11 {
      %c0_9 = arith.constant 0 : index
      %c0_10 = arith.constant 0 : index
      %12 = vector.load %arg6[%c0_9, %c0_10] : memref<128x128xf32, #tpu.memory_space<vmem>>, vector<128x128xf32>
      %c0_11 = arith.constant 0 : index
      %c0_12 = arith.constant 0 : index
      %13 = vector.load %arg4[%c0_11, %c0_12] : memref<1x128xf32, #tpu.memory_space<vmem>>, vector<1x128xf32>
      %14 = vector.broadcast %13 : vector<1x128xf32> to vector<128x128xf32>
      %15 = arith.addf %12, %14 : vector<128x128xf32>
      %c0_13 = arith.constant 0 : index
      %c0_14 = arith.constant 0 : index
      %16 = vector.load %arg6[%c0_13, %c0_14] : memref<128x128xf32, #tpu.memory_space<vmem>>, vector<128x128xf32>
      tpu.vector_store %arg6[%c0_13, %c0_14], %15 {strides = array<i32>} : memref<128x128xf32, #tpu.memory_space<vmem>>, vector<128x128xf32>,
      %c0_15 = arith.constant 0 : index
      %c0_16 = arith.constant 0 : index
      %17 = vector.load %arg5[%c0_15, %c0_16] : memref<128x1xf32, #tpu.memory_space<vmem>>, vector<128x1xf32>
      %18 = vector.broadcast %17 : vector<128x1xf32> to vector<128x128xf32>
      %19 = arith.mulf %15, %18 : vector<128x128xf32>
      %cst_17 = arith.constant dense<0.000000e+00> : vector<128xf32>
      %20 = vector.multi_reduction <add>, %19, %cst_17 [0] : vector<128x128xf32> to vector<128xf32>
      %21 = vector.shape_cast %20 : vector<128xf32> to vector<1x128xf32>
      %22 = arith.mulf %19, %15 : vector<128x128xf32>
      %cst_18 = arith.constant dense<0.000000e+00> : vector<128xf32>
      %23 = vector.multi_reduction <add>, %22, %cst_18 [0] : vector<128x128xf32> to vector<128xf32>
      %24 = vector.shape_cast %23 : vector<128xf32> to vector<1x128xf32>
      %25 = vector.shape_cast %21 : vector<1x128xf32> to vector<1x1x128xf32>
      %26 = vector.shape_cast %25 : vector<1x1x128xf32> to vector<1x1x128xf32>
      %27 = vector.broadcast %26 : vector<1x1x128xf32> to vector<1x8x128xf32>
      %c0_19 = arith.constant 0 : index
      %c0_20 = arith.constant 0 : index
      %c0_21 = arith.constant 0 : index
      %28 = vector.load %arg7[%c0_19, %c0_20, %c0_21] : memref<1x8x128xf32, #tpu.memory_space<vmem>>, vector<1x8x128xf32>
      tpu.vector_store %arg7[%c0_19, %c0_20, %c0_21], %27 {strides = array<i32>} : memref<1x8x128xf32, #tpu.memory_space<vmem>>, vector<1x8x128xf32>,
      %29 = vector.shape_cast %24 : vector<1x128xf32> to vector<1x1x128xf32>
      %30 = vector.shape_cast %29 : vector<1x1x128xf32> to vector<1x1x128xf32>
      %31 = vector.broadcast %30 : vector<1x1x128xf32> to vector<1x8x128xf32>
      %c0_22 = arith.constant 0 : index
      %c0_23 = arith.constant 0 : index
      %c0_24 = arith.constant 0 : index
      %32 = vector.load %arg8[%c0_22, %c0_23, %c0_24] : memref<1x8x128xf32, #tpu.memory_space<vmem>>, vector<1x8x128xf32>
      tpu.vector_store %arg8[%c0_22, %c0_23, %c0_24], %31 {strides = array<i32>} : memref<1x8x128xf32, #tpu.memory_space<vmem>>, vector<1x8x128xf32>,
    } else {
    }
    return
  }
  func.func @transform_0(%arg0: i32, %arg1: i32) -> (i32, i32) {
    %c0_i32 = arith.constant 0 : i32
    return %arg0, %arg1 : i32, i32
  }
  func.func @transform_1(%arg0: i32, %arg1: i32) -> (i32, i32) {
    %c0_i32 = arith.constant 0 : i32
    %c0_i32_0 = arith.constant 0 : i32
    return %arg1, %c0_i32 : i32, i32
  }
  func.func @transform_2(%arg0: i32, %arg1: i32) -> (i32, i32) {
    %c0_i32 = arith.constant 0 : i32
    %c0_i32_0 = arith.constant 0 : i32
    %c0_i32_1 = arith.constant 0 : i32
    return %c0_i32, %c0_i32_0 : i32, i32
  }
  func.func @transform_3(%arg0: i32, %arg1: i32) -> (i32, i32) {
    %c0_i32 = arith.constant 0 : i32
    %c0_i32_0 = arith.constant 0 : i32
    return %arg0, %c0_i32 : i32, i32
  }
  func.func @transform_4(%arg0: i32, %arg1: i32) -> (i32, i32) {
    %c0_i32 = arith.constant 0 : i32
    %c0_i32_0 = arith.constant 0 : i32
    return %arg0, %c0_i32 : i32, i32
  }
  func.func @transform_5(%arg0: i32, %arg1: i32) -> (i32, i32, i32) {
    %c0_i32 = arith.constant 0 : i32
    %c0_i32_0 = arith.constant 0 : i32
    %c0_i32_1 = arith.constant 0 : i32
    return %arg0, %c0_i32, %c0_i32_0 : i32, i32, i32
  }
  func.func @transform_6(%arg0: i32, %arg1: i32) -> (i32, i32, i32) {
    %c0_i32 = arith.constant 0 : i32
    %c0_i32_0 = arith.constant 0 : i32
    %c0_i32_1 = arith.constant 0 : i32
    return %arg0, %c0_i32, %c0_i32_0 : i32, i32, i32
  }
}

module attributes {stable_mosaic.version = 11 : i64} {
  func.func @_transform_kernel(%arg0: i32, %arg1: memref<128x128xf32, #tpu.memory_space<vmem>>, %arg2: memref<1x128xf32, #tpu.memory_space<vmem>>, %arg3: memref<1x128xf32, #tpu.memory_space<vmem>>, %arg4: memref<128x128xbf16, #tpu.memory_space<vmem>>, %arg5: memref<128x128xbf16, #tpu.memory_space<vmem>>) attributes {dimension_semantics = [#tpu.dimension_semantics<parallel>], iteration_bounds = array<i64: 3>, scalar_prefetch = 0 : i64, scratch_operands = 0 : i64, tpu.core_type = #tpu.core_type<tc>, window_params = [{transform_indices = @transform_0, window_bounds = array<i64: 128, 128>}, {pipeline_mode = #tpu.pipeline_mode<synchronous>, transform_indices = @transform_1, window_bounds = array<i64: 1, 128>}, {pipeline_mode = #tpu.pipeline_mode<synchronous>, transform_indices = @transform_2, window_bounds = array<i64: 1, 128>}, {pipeline_mode = #tpu.pipeline_mode<synchronous>, transform_indices = @transform_3, window_bounds = array<i64: 128, 128>}, {transform_indices = @transform_4, window_bounds = array<i64: 128, 128>}]} {
    %c0 = arith.constant 0 : index
    %c0_0 = arith.constant 0 : index
    %0 = vector.load %arg1[%c0, %c0_0] : memref<128x128xf32, #tpu.memory_space<vmem>>, vector<128x128xf32>
    %c0_1 = arith.constant 0 : index
    %c0_2 = arith.constant 0 : index
    %1 = vector.load %arg2[%c0_1, %c0_2] : memref<1x128xf32, #tpu.memory_space<vmem>>, vector<1x128xf32>
    %2 = vector.broadcast %1 : vector<1x128xf32> to vector<128x128xf32>
    %3 = arith.mulf %0, %2 : vector<128x128xf32>
    %c0_3 = arith.constant 0 : index
    %c0_4 = arith.constant 0 : index
    %4 = vector.load %arg3[%c0_3, %c0_4] : memref<1x128xf32, #tpu.memory_space<vmem>>, vector<1x128xf32>
    %5 = vector.broadcast %4 : vector<1x128xf32> to vector<128x128xf32>
    %6 = arith.addf %3, %5 : vector<128x128xf32>
    %cst = arith.constant 0.000000e+00 : f32
    %7 = vector.broadcast %cst : f32 to vector<128x128xf32>
    %8 = arith.maximumf %6, %7 : vector<128x128xf32>
    %9 = arith.truncf %8 : vector<128x128xf32> to vector<128x128xbf16>
    %c0_5 = arith.constant 0 : index
    %c0_6 = arith.constant 0 : index
    %10 = vector.load %arg4[%c0_5, %c0_6] : memref<128x128xbf16, #tpu.memory_space<vmem>>, vector<128x128xbf16>
    %cst_7 = arith.constant dense<0.000000e+00> : vector<128x128xf32>
    %11 = tpu.matmul %9, %10, %cst_7 {dimension_numbers = #tpu.dot_dimension_numbers<[1], [0], [0], [1], [0, 0, 1, 1], [], []>} : vector<128x128xbf16>, vector<128x128xbf16>, vector<128x128xf32> -> vector<128x128xf32>
    %12 = arith.truncf %11 : vector<128x128xf32> to vector<128x128xbf16>
    %c0_8 = arith.constant 0 : index
    %c0_9 = arith.constant 0 : index
    %13 = vector.load %arg5[%c0_8, %c0_9] : memref<128x128xbf16, #tpu.memory_space<vmem>>, vector<128x128xbf16>
    tpu.vector_store %arg5[%c0_8, %c0_9], %12 {strides = array<i32>} : memref<128x128xbf16, #tpu.memory_space<vmem>>, vector<128x128xbf16>,
    return
  }
  func.func @transform_0(%arg0: i32) -> (i32, i32) {
    %c0_i32 = arith.constant 0 : i32
    %c0_i32_0 = arith.constant 0 : i32
    return %arg0, %c0_i32 : i32, i32
  }
  func.func @transform_1(%arg0: i32) -> (i32, i32) {
    %c0_i32 = arith.constant 0 : i32
    %c0_i32_0 = arith.constant 0 : i32
    %c0_i32_1 = arith.constant 0 : i32
    return %c0_i32, %c0_i32_0 : i32, i32
  }
  func.func @transform_2(%arg0: i32) -> (i32, i32) {
    %c0_i32 = arith.constant 0 : i32
    %c0_i32_0 = arith.constant 0 : i32
    %c0_i32_1 = arith.constant 0 : i32
    return %c0_i32, %c0_i32_0 : i32, i32
  }
  func.func @transform_3(%arg0: i32) -> (i32, i32) {
    %c0_i32 = arith.constant 0 : i32
    %c0_i32_0 = arith.constant 0 : i32
    %c0_i32_1 = arith.constant 0 : i32
    return %c0_i32, %c0_i32_0 : i32, i32
  }
  func.func @transform_4(%arg0: i32) -> (i32, i32) {
    %c0_i32 = arith.constant 0 : i32
    %c0_i32_0 = arith.constant 0 : i32
    return %arg0, %c0_i32 : i32, i32
  }
}

module attributes {stable_mosaic.version = 11 : i64} {
  func.func @_affine_kernel(%arg0: i32, %arg1: memref<128x128xf32, #tpu.memory_space<vmem>>, %arg2: memref<1x128xf32, #tpu.memory_space<vmem>>, %arg3: memref<1x128xf32, #tpu.memory_space<vmem>>, %arg4: memref<128x128xf32, #tpu.memory_space<vmem>>) attributes {dimension_semantics = [#tpu.dimension_semantics<parallel>], iteration_bounds = array<i64: 3>, scalar_prefetch = 0 : i64, scratch_operands = 0 : i64, tpu.core_type = #tpu.core_type<tc>, window_params = [{transform_indices = @transform_0, window_bounds = array<i64: 128, 128>}, {pipeline_mode = #tpu.pipeline_mode<synchronous>, transform_indices = @transform_1, window_bounds = array<i64: 1, 128>}, {pipeline_mode = #tpu.pipeline_mode<synchronous>, transform_indices = @transform_2, window_bounds = array<i64: 1, 128>}, {transform_indices = @transform_3, window_bounds = array<i64: 128, 128>}]} {
    %c0 = arith.constant 0 : index
    %c0_0 = arith.constant 0 : index
    %0 = vector.load %arg1[%c0, %c0_0] : memref<128x128xf32, #tpu.memory_space<vmem>>, vector<128x128xf32>
    %c0_1 = arith.constant 0 : index
    %c0_2 = arith.constant 0 : index
    %1 = vector.load %arg2[%c0_1, %c0_2] : memref<1x128xf32, #tpu.memory_space<vmem>>, vector<1x128xf32>
    %2 = vector.broadcast %1 : vector<1x128xf32> to vector<128x128xf32>
    %3 = arith.mulf %0, %2 : vector<128x128xf32>
    %c0_3 = arith.constant 0 : index
    %c0_4 = arith.constant 0 : index
    %4 = vector.load %arg3[%c0_3, %c0_4] : memref<1x128xf32, #tpu.memory_space<vmem>>, vector<1x128xf32>
    %5 = vector.broadcast %4 : vector<1x128xf32> to vector<128x128xf32>
    %6 = arith.addf %3, %5 : vector<128x128xf32>
    %c0_5 = arith.constant 0 : index
    %c0_6 = arith.constant 0 : index
    %7 = vector.load %arg4[%c0_5, %c0_6] : memref<128x128xf32, #tpu.memory_space<vmem>>, vector<128x128xf32>
    tpu.vector_store %arg4[%c0_5, %c0_6], %6 {strides = array<i32>} : memref<128x128xf32, #tpu.memory_space<vmem>>, vector<128x128xf32>,
    return
  }
  func.func @transform_0(%arg0: i32) -> (i32, i32) {
    %c0_i32 = arith.constant 0 : i32
    %c0_i32_0 = arith.constant 0 : i32
    return %arg0, %c0_i32 : i32, i32
  }
  func.func @transform_1(%arg0: i32) -> (i32, i32) {
    %c0_i32 = arith.constant 0 : i32
    %c0_i32_0 = arith.constant 0 : i32
    %c0_i32_1 = arith.constant 0 : i32
    return %c0_i32, %c0_i32_0 : i32, i32
  }
  func.func @transform_2(%arg0: i32) -> (i32, i32) {
    %c0_i32 = arith.constant 0 : i32
    %c0_i32_0 = arith.constant 0 : i32
    %c0_i32_1 = arith.constant 0 : i32
    return %c0_i32, %c0_i32_0 : i32, i32
  }
  func.func @transform_3(%arg0: i32) -> (i32, i32) {
    %c0_i32 = arith.constant 0 : i32
    %c0_i32_0 = arith.constant 0 : i32
    return %arg0, %c0_i32 : i32, i32
  }
}

</mosaic_0001>

<llo_original>
// kernel: gcn_encoder.9
$region0: #{gcn_encoder.9}
  #allocation0 [shape = 'u32[]', space=smem, size = 0x4, offset = 0x4, fixed_abs, tag = 'smem constant byte address 0x4 - core index']
  #allocation1 [shape = 'u32[72,128]{1,0:T(1,128)}', space=vmem, size = 0x9000, scoped, tag = 'internal scratch']
  %s0 = inlined_call_operand.vmem [shape: f32[384,128], index: 0, kind: input, shape index: {}]
  %s1 = inlined_call_operand.vmem [shape: f32[1,128], index: 1, kind: input, shape index: {}]
  %s2 = inlined_call_operand.vmem [shape: f32[1,128], index: 2, kind: input, shape index: {}]
  %s3 = inlined_call_operand.vmem [shape: f32[384,128], index: 3, kind: output, shape index: {}]
  %s4 = sld [smem:[#allocation0]]
  $region45: #{gcn_encoder.9} parent=0
    _
  %s6 = ssub.s32 1, %s4
  %s7 = scalar_select 0, %s6, %s4
  loop: start=0, step=1, limit=5
  $region2: #{gcn_encoder.9} parent=0 // loop_pre_header
    _
  $region3: #{gcn_encoder.9} parent=0 // loop_header
    %s9 = sphi 0, %s13
    %p10 = scmp.ge.s32.totalorder %s9, 5
    %s19 = sphi 0, %s21
    %s22 = sphi 0, %s19
    %s23 = sphi 0, %s22
    %s39 = sphi 0, %s23
    %s43 = sphi 0, %s43
    %s45 = sphi 0, %s43
    %s46 = sphi 0, %s45
    %s60 = sphi 0, %s46
    %s64 = sphi 0, %s64
    %s66 = sphi 0, %s64
    %s67 = sphi 0, %s66
    %s81 = sphi 0, %s67
    %s87 = sphi 0, %s89
    %s90 = sphi 0, %s87
    %s91 = sphi 0, %s90
    %s107 = sphi 0, %s91
  $region4: #{gcn_encoder.9} parent=0 // loop_header_branch
    %12 = sbr.rel (%p10) target = $region8
  $region5: #{gcn_encoder.9} parent=0 // loop_body
    %s14 = ssub.s32 %s9, 1
    %s15 = ssub.s32 %s9, 2
    %s16 = sadd.s32 %s9, 1
    %s17 = ssub.s32 %s9, %s16
    %p18 = scmp.eq.s32.totalorder %s17, 0
    %s20 = sadd.s32 %s19, 1
    %s21 = scalar_select %p18, %s19, %s20
    %p24 = pneg %p18
    %p25 = scmp.eq.s32.totalorder %s9, 2
    %p26 = por %p24, %p25
    %p27 = scmp.ne.s32.totalorder %s19, %s22
    %p28 = scmp.eq.s32.totalorder %s9, 0
    %p29 = por %p27, %p28
    %p30 = scmp.ne.s32.totalorder %s19, %s22
    %p31 = scmp.eq.s32.totalorder %s14, 2
    %p32 = por %p30, %p31
    %p33 = scmp.ne.s32.totalorder %s22, %s23
    %p34 = scmp.eq.s32.totalorder %s14, 0
    %p35 = por %p33, %p34
    %p36 = scmp.ne.s32.totalorder %s22, %s23
    %p37 = scmp.eq.s32.totalorder %s15, 2
    %p38 = por %p36, %p37
    %p40 = scmp.ne.s32.totalorder %s23, %s39
    %p41 = scmp.eq.s32.totalorder %s15, 0
    %p42 = por %p40, %p41
    %s44 = sadd.s32 %s43, 1
    %p47 = scmp.eq.s32.totalorder %s9, 2
    %p48 = scmp.ne.s32.totalorder %s43, %s45
    %p49 = scmp.eq.s32.totalorder %s9, 0
    %p50 = por %p48, %p49
    %p51 = scmp.ne.s32.totalorder %s43, %s45
    %p52 = scmp.eq.s32.totalorder %s14, 2
    %p53 = por %p51, %p52
    %p54 = scmp.ne.s32.totalorder %s45, %s46
    %p55 = scmp.eq.s32.totalorder %s14, 0
    %p56 = por %p54, %p55
    %p57 = scmp.ne.s32.totalorder %s45, %s46
    %p58 = scmp.eq.s32.totalorder %s15, 2
    %p59 = por %p57, %p58
    %p61 = scmp.ne.s32.totalorder %s46, %s60
    %p62 = scmp.eq.s32.totalorder %s15, 0
    %p63 = por %p61, %p62
    %s65 = sadd.s32 %s64, 1
    %p68 = scmp.eq.s32.totalorder %s9, 2
    %p69 = scmp.ne.s32.totalorder %s64, %s66
    %p70 = scmp.eq.s32.totalorder %s9, 0
    %p71 = por %p69, %p70
    %p72 = scmp.ne.s32.totalorder %s64, %s66
    %p73 = scmp.eq.s32.totalorder %s14, 2
    %p74 = por %p72, %p73
    %p75 = scmp.ne.s32.totalorder %s66, %s67
    %p76 = scmp.eq.s32.totalorder %s14, 0
    %p77 = por %p75, %p76
    %p78 = scmp.ne.s32.totalorder %s66, %s67
    %p79 = scmp.eq.s32.totalorder %s15, 2
    %p80 = por %p78, %p79
    %p82 = scmp.ne.s32.totalorder %s67, %s81
    %p83 = scmp.eq.s32.totalorder %s15, 0
    %p84 = por %p82, %p83
    %s85 = ssub.s32 %s9, %s16
    %p86 = scmp.eq.s32.totalorder %s85, 0
    %s88 = sadd.s32 %s87, 1
    %s89 = scalar_select %p86, %s87, %s88
    %p92 = pneg %p86
    %p93 = scmp.eq.s32.totalorder %s9, 2
    %p94 = por %p92, %p93
    %p95 = scmp.ne.s32.totalorder %s87, %s90
    %p96 = scmp.eq.s32.totalorder %s9, 0
    %p97 = por %p95, %p96
    %p98 = scmp.ne.s32.totalorder %s87, %s90
    %p99 = scmp.eq.s32.totalorder %s14, 2
    %p100 = por %p98, %p99
    %p101 = scmp.ne.s32.totalorder %s90, %s91
    %p102 = scmp.eq.s32.totalorder %s14, 0
    %p103 = por %p101, %p102
    %p104 = scmp.ne.s32.totalorder %s90, %s91
    %p105 = scmp.eq.s32.totalorder %s15, 2
    %p106 = por %p104, %p105
    %p108 = scmp.ne.s32.totalorder %s91, %s107
    %p109 = scmp.eq.s32.totalorder %s15, 0
    %p110 = por %p108, %p109
    %p111 = scmp.le.s32.totalorder 1, %s9
    %p112 = scmp.lt.s32.totalorder %s9, 4
    %p113 = pnand %p111, %p112
    %p114 = pneg %p113
    // Predicated region
    $region9: #{gcn_encoder.9} parent=5 // pred_check
      _
    $region10: #{gcn_encoder.9} parent=5 // pred_check_branch
      %116 = sbr.rel (%p113) target = $region12
    $region11: #{gcn_encoder.9} parent=5 // pred_region
      %s117 = ssub.s32 %s9, 1
      // Predicated region
      $region13: #{gcn_encoder.9} parent=11 // pred_check
        %p118 = pneg %p56
      $region14: #{gcn_encoder.9} parent=11 // pred_check_branch
        %120 = sbr.rel (%p118) target = $region16
      $region15: #{gcn_encoder.9} parent=11 // pred_region
        _
      $region16: #{gcn_encoder.9} parent=11 // pred_fallthru
        _
      // Predicated region
      $region17: #{gcn_encoder.9} parent=11 // pred_check
        %p121 = pneg %p77
      $region18: #{gcn_encoder.9} parent=11 // pred_check_branch
        %123 = sbr.rel (%p121) target = $region20
      $region19: #{gcn_encoder.9} parent=11 // pred_region
        _
      $region20: #{gcn_encoder.9} parent=11 // pred_fallthru
        _
    $region12: #{gcn_encoder.9} parent=5 // pred_fallthru
      _
    %p124 = scmp.lt.s32.totalorder %s9, 3
    // Predicated region
    $region21: #{gcn_encoder.9} parent=5 // pred_check
      %p125 = pneg %p124
    $region22: #{gcn_encoder.9} parent=5 // pred_check_branch
      %127 = sbr.rel (%p125) target = $region24
    $region23: #{gcn_encoder.9} parent=5 // pred_region
      // Predicated region
      $region25: #{gcn_encoder.9} parent=23 // pred_check
        %p128 = pneg %p29
      $region26: #{gcn_encoder.9} parent=23 // pred_check_branch
        %130 = sbr.rel (%p128) target = $region28
      $region27: #{gcn_encoder.9} parent=23 // pred_region
        %s131 = smul.u32 16, %s9
        %p132 = scmp.lt.s32.totalorder %s131, 47
        %s133 = scalar_select %p132, %s131, 47
        %s134 = smul.addr %s133, 8
        %s135 = scalar_lea.vmem %s0, %s134
        %s136 = smul.u32 16, %s9
      $region28: #{gcn_encoder.9} parent=23 // pred_fallthru
        _
    $region24: #{gcn_encoder.9} parent=5 // pred_fallthru
      _
    %p137 = scmp.le.s32.totalorder 1, %s9
    %p138 = scmp.lt.s32.totalorder %s9, 4
    %p139 = pnand %p137, %p138
    %p140 = pneg %p139
    // Predicated region
    $region29: #{gcn_encoder.9} parent=5 // pred_check
      _
    $region30: #{gcn_encoder.9} parent=5 // pred_check_branch
      %142 = sbr.rel (%p139) target = $region32
    $region31: #{gcn_encoder.9} parent=5 // pred_region
      %s143 = ssub.s32 %s9, 1
      %s144 = smul.u32 16, %s14
      %p145 = scmp.lt.s32.totalorder %s144, 47
      %s146 = scalar_select %p145, %s144, 47
      %s147 = smul.addr %s146, 8
      %s148 = scalar_lea.vmem %s0, %s147
      %p149 = pneg %p35
      %p150 = pneg %p32
      %p151 = pneg %p56
      %p152 = pneg %p53
      %p153 = pneg %p77
      %p154 = pneg %p74
      %p155 = pneg %p103
      %p156 = pneg %p100
      %s157 = smul.u32 16, %s14
      %p158 = scmp.lt.s32.totalorder %s157, 47
      %s159 = scalar_select %p158, %s157, 47
      %s160 = smul.addr %s159, 8
      %s161 = scalar_lea.vmem %s3, %s160
      %s162 = smul.u32 16, %s14
      %p163 = scmp.lt.s32.totalorder %s162, 47
      %s164 = scalar_select %p163, %s162, 47
      %s165 = smul.addr %s164, 8
      %s166 = scalar_lea.vmem %s0, %s165
      %s167 = smul.u32 16, %s14
      %s168 = smul.u32 16, %s14
      %p169 = scmp.lt.s32.totalorder %s168, 47
      %s170 = scalar_select %p169, %s168, 47
      %s171 = smul.addr %s170, 8
      %s172 = scalar_lea.vmem %s3, %s171
      %s173 = smul.u32 16, %s14
      %v174 = vld [vmem:[%s166] sm:$0xff]
      %v175 = vld [vmem:[%s166 + $0x8] sm:$0xff]
      %v176 = vld [vmem:[%s166 + $0x10] sm:$0xff]
      %v177 = vld [vmem:[%s166 + $0x18] sm:$0xff]
      %v178 = vld [vmem:[%s166 + $0x20] sm:$0xff]
      %v179 = vld [vmem:[%s166 + $0x28] sm:$0xff]
      %v180 = vld [vmem:[%s166 + $0x30] sm:$0xff]
      %v181 = vld [vmem:[%s166 + $0x38] sm:$0xff]
      %v182 = vld [vmem:[%s166 + $0x40] sm:$0xff]
      %v183 = vld [vmem:[%s166 + $0x48] sm:$0xff]
      %v184 = vld [vmem:[%s166 + $0x50] sm:$0xff]
      %v185 = vld [vmem:[%s166 + $0x58] sm:$0xff]
      %v186 = vld [vmem:[%s166 + $0x60] sm:$0xff]
      %v187 = vld [vmem:[%s166 + $0x68] sm:$0xff]
      %v188 = vld [vmem:[%s166 + $0x70] sm:$0xff]
      %v189 = vld [vmem:[%s166 + $0x78] sm:$0xff]
      %v190 = vld [vmem:[%s1] sm:$0x1]
      %v192 = vperm.slane %v190, 0
      %v194 = vmul.f32 %v174, %v192
      %v195 = vmul.f32 %v175, %v192
      %v196 = vmul.f32 %v176, %v192
      %v197 = vmul.f32 %v177, %v192
      %v198 = vmul.f32 %v178, %v192
      %v199 = vmul.f32 %v179, %v192
      %v200 = vmul.f32 %v180, %v192
      %v201 = vmul.f32 %v181, %v192
      %v202 = vmul.f32 %v182, %v192
      %v203 = vmul.f32 %v183, %v192
      %v204 = vmul.f32 %v184, %v192
      %v205 = vmul.f32 %v185, %v192
      %v206 = vmul.f32 %v186, %v192
      %v207 = vmul.f32 %v187, %v192
      %v208 = vmul.f32 %v188, %v192
      %v209 = vmul.f32 %v189, %v192
      %v210 = vld [vmem:[%s2] sm:$0x1]
      %v212 = vperm.slane %v210, 0
      %v214 = vadd.f32 %v194, %v212
      %v215 = vadd.f32 %v195, %v212
      %v216 = vadd.f32 %v196, %v212
      %v217 = vadd.f32 %v197, %v212
      %v218 = vadd.f32 %v198, %v212
      %v219 = vadd.f32 %v199, %v212
      %v220 = vadd.f32 %v200, %v212
      %v221 = vadd.f32 %v201, %v212
      %v222 = vadd.f32 %v202, %v212
      %v223 = vadd.f32 %v203, %v212
      %v224 = vadd.f32 %v204, %v212
      %v225 = vadd.f32 %v205, %v212
      %v226 = vadd.f32 %v206, %v212
      %v227 = vadd.f32 %v207, %v212
      %v228 = vadd.f32 %v208, %v212
      %v229 = vadd.f32 %v209, %v212
      %230 = vst [vmem:[%s172] sm:$0xff] %v214
      %231 = vst [vmem:[%s172 + $0x8] sm:$0xff] %v215
      %232 = vst [vmem:[%s172 + $0x10] sm:$0xff] %v216
      %233 = vst [vmem:[%s172 + $0x18] sm:$0xff] %v217
      %234 = vst [vmem:[%s172 + $0x20] sm:$0xff] %v218
      %235 = vst [vmem:[%s172 + $0x28] sm:$0xff] %v219
      %236 = vst [vmem:[%s172 + $0x30] sm:$0xff] %v220
      %237 = vst [vmem:[%s172 + $0x38] sm:$0xff] %v221
      %238 = vst [vmem:[%s172 + $0x40] sm:$0xff] %v222
      %239 = vst [vmem:[%s172 + $0x48] sm:$0xff] %v223
      %240 = vst [vmem:[%s172 + $0x50] sm:$0xff] %v224
      %241 = vst [vmem:[%s172 + $0x58] sm:$0xff] %v225
      %242 = vst [vmem:[%s172 + $0x60] sm:$0xff] %v226
      %243 = vst [vmem:[%s172 + $0x68] sm:$0xff] %v227
      %244 = vst [vmem:[%s172 + $0x70] sm:$0xff] %v228
      %245 = vst [vmem:[%s172 + $0x78] sm:$0xff] %v229
      %s246 = smul.u32 16, %s14
      %p247 = scmp.lt.s32.totalorder %s246, 47
      %s248 = scalar_select %p247, %s246, 47
      %s249 = smul.addr %s248, 8
      %s250 = scalar_lea.vmem %s3, %s249
      // Predicated region
      $region33: #{gcn_encoder.9} parent=31 // pred_check
        %p251 = pneg %p100
      $region34: #{gcn_encoder.9} parent=31 // pred_check_branch
        %253 = sbr.rel (%p251) target = $region36
      $region35: #{gcn_encoder.9} parent=31 // pred_region
        %s254 = smul.u32 16, %s14
      $region36: #{gcn_encoder.9} parent=31 // pred_fallthru
        _
    $region32: #{gcn_encoder.9} parent=5 // pred_fallthru
      _
    %p255 = scmp.le.s32.totalorder 2, %s9
    // Predicated region
    $region37: #{gcn_encoder.9} parent=5 // pred_check
      %p256 = pneg %p255
    $region38: #{gcn_encoder.9} parent=5 // pred_check_branch
      %258 = sbr.rel (%p256) target = $region40
    $region39: #{gcn_encoder.9} parent=5 // pred_region
      %s259 = ssub.s32 %s9, 2
      // Predicated region
      $region41: #{gcn_encoder.9} parent=39 // pred_check
        %p260 = pneg %p106
      $region42: #{gcn_encoder.9} parent=39 // pred_check_branch
        %262 = sbr.rel (%p260) target = $region44
      $region43: #{gcn_encoder.9} parent=39 // pred_region
        %s263 = smul.u32 16, %s15
        %p264 = scmp.lt.s32.totalorder %s263, 47
        %s265 = scalar_select %p264, %s263, 47
        %s266 = smul.addr %s265, 8
        %s267 = scalar_lea.vmem %s3, %s266
      $region44: #{gcn_encoder.9} parent=39 // pred_fallthru
        _
    $region40: #{gcn_encoder.9} parent=5 // pred_fallthru
      _
  $region6: #{gcn_encoder.9} parent=0 // loop_footer
    %s13 = sadd.s32 1, %s9
  $region7: #{gcn_encoder.9} parent=0 // loop_footer_branch
    %8 = sbr.rel target = $region3
  $region8: #{gcn_encoder.9} parent=0 // loop_exit
    _

// kernel: gcn_encoder.7
$region0: #{gcn_encoder.7}
  #allocation0 [shape = 'u32[]', space=smem, size = 0x4, offset = 0x4, fixed_abs, tag = 'smem constant byte address 0x4 - core index']
  #allocation1 [shape = 'u32[72,128]{1,0:T(1,128)}', space=vmem, size = 0x9000, scoped, tag = 'internal scratch']
  %s0 = inlined_call_operand.vmem [shape: f32[384,128], index: 0, kind: input, shape index: {}]
  %s1 = inlined_call_operand.vmem [shape: f32[1,128], index: 1, kind: input, shape index: {}]
  %s2 = inlined_call_operand.vmem [shape: f32[1,128], index: 2, kind: input, shape index: {}]
  %s3 = inlined_call_operand.vmem [shape: bf16[128,128], index: 3, kind: input, shape index: {}]
  %s4 = inlined_call_operand.vmem [shape: bf16[384,128], index: 4, kind: output, shape index: {}]
  %s5 = sld [smem:[#allocation0]]
  $region49: #{gcn_encoder.7} parent=0
    _
  %s7 = ssub.s32 1, %s5
  %s8 = scalar_select 0, %s7, %s5
  loop: start=0, step=1, limit=5
  $region2: #{gcn_encoder.7} parent=0 // loop_pre_header
    _
  $region3: #{gcn_encoder.7} parent=0 // loop_header
    %s10 = sphi 0, %s14
    %p11 = scmp.ge.s32.totalorder %s10, 5
    %s20 = sphi 0, %s22
    %s23 = sphi 0, %s20
    %s24 = sphi 0, %s23
    %s40 = sphi 0, %s24
    %s44 = sphi 0, %s44
    %s46 = sphi 0, %s44
    %s47 = sphi 0, %s46
    %s61 = sphi 0, %s47
    %s65 = sphi 0, %s65
    %s67 = sphi 0, %s65
    %s68 = sphi 0, %s67
    %s82 = sphi 0, %s68
    %s86 = sphi 0, %s86
    %s88 = sphi 0, %s86
    %s89 = sphi 0, %s88
    %s103 = sphi 0, %s89
    %s109 = sphi 0, %s111
    %s112 = sphi 0, %s109
    %s113 = sphi 0, %s112
    %s129 = sphi 0, %s113
  $region4: #{gcn_encoder.7} parent=0 // loop_header_branch
    %13 = sbr.rel (%p11) target = $region8
  $region5: #{gcn_encoder.7} parent=0 // loop_body
    %s15 = ssub.s32 %s10, 1
    %s16 = ssub.s32 %s10, 2
    %s17 = sadd.s32 %s10, 1
    %s18 = ssub.s32 %s10, %s17
    %p19 = scmp.eq.s32.totalorder %s18, 0
    %s21 = sadd.s32 %s20, 1
    %s22 = scalar_select %p19, %s20, %s21
    %p25 = pneg %p19
    %p26 = scmp.eq.s32.totalorder %s10, 2
    %p27 = por %p25, %p26
    %p28 = scmp.ne.s32.totalorder %s20, %s23
    %p29 = scmp.eq.s32.totalorder %s10, 0
    %p30 = por %p28, %p29
    %p31 = scmp.ne.s32.totalorder %s20, %s23
    %p32 = scmp.eq.s32.totalorder %s15, 2
    %p33 = por %p31, %p32
    %p34 = scmp.ne.s32.totalorder %s23, %s24
    %p35 = scmp.eq.s32.totalorder %s15, 0
    %p36 = por %p34, %p35
    %p37 = scmp.ne.s32.totalorder %s23, %s24
    %p38 = scmp.eq.s32.totalorder %s16, 2
    %p39 = por %p37, %p38
    %p41 = scmp.ne.s32.totalorder %s24, %s40
    %p42 = scmp.eq.s32.totalorder %s16, 0
    %p43 = por %p41, %p42
    %s45 = sadd.s32 %s44, 1
    %p48 = scmp.eq.s32.totalorder %s10, 2
    %p49 = scmp.ne.s32.totalorder %s44, %s46
    %p50 = scmp.eq.s32.totalorder %s10, 0
    %p51 = por %p49, %p50
    %p52 = scmp.ne.s32.totalorder %s44, %s46
    %p53 = scmp.eq.s32.totalorder %s15, 2
    %p54 = por %p52, %p53
    %p55 = scmp.ne.s32.totalorder %s46, %s47
    %p56 = scmp.eq.s32.totalorder %s15, 0
    %p57 = por %p55, %p56
    %p58 = scmp.ne.s32.totalorder %s46, %s47
    %p59 = scmp.eq.s32.totalorder %s16, 2
    %p60 = por %p58, %p59
    %p62 = scmp.ne.s32.totalorder %s47, %s61
    %p63 = scmp.eq.s32.totalorder %s16, 0
    %p64 = por %p62, %p63
    %s66 = sadd.s32 %s65, 1
    %p69 = scmp.eq.s32.totalorder %s10, 2
    %p70 = scmp.ne.s32.totalorder %s65, %s67
    %p71 = scmp.eq.s32.totalorder %s10, 0
    %p72 = por %p70, %p71
    %p73 = scmp.ne.s32.totalorder %s65, %s67
    %p74 = scmp.eq.s32.totalorder %s15, 2
    %p75 = por %p73, %p74
    %p76 = scmp.ne.s32.totalorder %s67, %s68
    %p77 = scmp.eq.s32.totalorder %s15, 0
    %p78 = por %p76, %p77
    %p79 = scmp.ne.s32.totalorder %s67, %s68
    %p80 = scmp.eq.s32.totalorder %s16, 2
    %p81 = por %p79, %p80
    %p83 = scmp.ne.s32.totalorder %s68, %s82
    %p84 = scmp.eq.s32.totalorder %s16, 0
    %p85 = por %p83, %p84
    %s87 = sadd.s32 %s86, 1
    %p90 = scmp.eq.s32.totalorder %s10, 2
    %p91 = scmp.ne.s32.totalorder %s86, %s88
    %p92 = scmp.eq.s32.totalorder %s10, 0
    %p93 = por %p91, %p92
    %p94 = scmp.ne.s32.totalorder %s86, %s88
    %p95 = scmp.eq.s32.totalorder %s15, 2
    %p96 = por %p94, %p95
    %p97 = scmp.ne.s32.totalorder %s88, %s89
    %p98 = scmp.eq.s32.totalorder %s15, 0
    %p99 = por %p97, %p98
    %p100 = scmp.ne.s32.totalorder %s88, %s89
    %p101 = scmp.eq.s32.totalorder %s16, 2
    %p102 = por %p100, %p101
    %p104 = scmp.ne.s32.totalorder %s89, %s103
    %p105 = scmp.eq.s32.totalorder %s16, 0
    %p106 = por %p104, %p105
    %s107 = ssub.s32 %s10, %s17
    %p108 = scmp.eq.s32.totalorder %s107, 0
    %s110 = sadd.s32 %s109, 1
    %s111 = scalar_select %p108, %s109, %s110
    %p114 = pneg %p108
    %p115 = scmp.eq.s32.totalorder %s10, 2
    %p116 = por %p114, %p115
    %p117 = scmp.ne.s32.totalorder %s109, %s112
    %p118 = scmp.eq.s32.totalorder %s10, 0
    %p119 = por %p117, %p118
    %p120 = scmp.ne.s32.totalorder %s109, %s112
    %p121 = scmp.eq.s32.totalorder %s15, 2
    %p122 = por %p120, %p121
    %p123 = scmp.ne.s32.totalorder %s112, %s113
    %p124 = scmp.eq.s32.totalorder %s15, 0
    %p125 = por %p123, %p124
    %p126 = scmp.ne.s32.totalorder %s112, %s113
    %p127 = scmp.eq.s32.totalorder %s16, 2
    %p128 = por %p126, %p127
    %p130 = scmp.ne.s32.totalorder %s113, %s129
    %p131 = scmp.eq.s32.totalorder %s16, 0
    %p132 = por %p130, %p131
    %p133 = scmp.le.s32.totalorder 1, %s10
    %p134 = scmp.lt.s32.totalorder %s10, 4
    %p135 = pnand %p133, %p134
    %p136 = pneg %p135
    // Predicated region
    $region9: #{gcn_encoder.7} parent=5 // pred_check
      _
    $region10: #{gcn_encoder.7} parent=5 // pred_check_branch
      %138 = sbr.rel (%p135) target = $region12
    $region11: #{gcn_encoder.7} parent=5 // pred_region
      %s139 = ssub.s32 %s10, 1
      // Predicated region
      $region13: #{gcn_encoder.7} parent=11 // pred_check
        %p140 = pneg %p57
      $region14: #{gcn_encoder.7} parent=11 // pred_check_branch
        %142 = sbr.rel (%p140) target = $region16
      $region15: #{gcn_encoder.7} parent=11 // pred_region
        _
      $region16: #{gcn_encoder.7} parent=11 // pred_fallthru
        _
      // Predicated region
      $region17: #{gcn_encoder.7} parent=11 // pred_check
        %p143 = pneg %p78
      $region18: #{gcn_encoder.7} parent=11 // pred_check_branch
        %145 = sbr.rel (%p143) target = $region20
      $region19: #{gcn_encoder.7} parent=11 // pred_region
        _
      $region20: #{gcn_encoder.7} parent=11 // pred_fallthru
        _
      // Predicated region
      $region21: #{gcn_encoder.7} parent=11 // pred_check
        %p146 = pneg %p99
      $region22: #{gcn_encoder.7} parent=11 // pred_check_branch
        %148 = sbr.rel (%p146) target = $region24
      $region23: #{gcn_encoder.7} parent=11 // pred_region
        _
      $region24: #{gcn_encoder.7} parent=11 // pred_fallthru
        _
    $region12: #{gcn_encoder.7} parent=5 // pred_fallthru
      _
    %p149 = scmp.lt.s32.totalorder %s10, 3
    // Predicated region
    $region25: #{gcn_encoder.7} parent=5 // pred_check
      %p150 = pneg %p149
    $region26: #{gcn_encoder.7} parent=5 // pred_check_branch
      %152 = sbr.rel (%p150) target = $region28
    $region27: #{gcn_encoder.7} parent=5 // pred_region
      // Predicated region
      $region29: #{gcn_encoder.7} parent=27 // pred_check
        %p153 = pneg %p30
      $region30: #{gcn_encoder.7} parent=27 // pred_check_branch
        %155 = sbr.rel (%p153) target = $region32
      $region31: #{gcn_encoder.7} parent=27 // pred_region
        %s156 = smul.u32 16, %s10
        %p157 = scmp.lt.s32.totalorder %s156, 47
        %s158 = scalar_select %p157, %s156, 47
        %s159 = smul.addr %s158, 8
        %s160 = scalar_lea.vmem %s0, %s159
        %s161 = smul.u32 16, %s10
      $region32: #{gcn_encoder.7} parent=27 // pred_fallthru
        _
    $region28: #{gcn_encoder.7} parent=5 // pred_fallthru
      _
    %p162 = scmp.le.s32.totalorder 1, %s10
    %p163 = scmp.lt.s32.totalorder %s10, 4
    %p164 = pnand %p162, %p163
    %p165 = pneg %p164
    // Predicated region
    $region33: #{gcn_encoder.7} parent=5 // pred_check
      _
    $region34: #{gcn_encoder.7} parent=5 // pred_check_branch
      %167 = sbr.rel (%p164) target = $region36
    $region35: #{gcn_encoder.7} parent=5 // pred_region
      %s168 = ssub.s32 %s10, 1
      %s169 = smul.u32 16, %s15
      %p170 = scmp.lt.s32.totalorder %s169, 47
      %s171 = scalar_select %p170, %s169, 47
      %s172 = smul.addr %s171, 8
      %s173 = scalar_lea.vmem %s0, %s172
      %p174 = pneg %p36
      %p175 = pneg %p33
      %p176 = pneg %p57
      %p177 = pneg %p54
      %p178 = pneg %p78
      %p179 = pneg %p75
      %p180 = pneg %p99
      %p181 = pneg %p96
      %p182 = pneg %p125
      %p183 = pneg %p122
      %s184 = smul.u32 16, %s15
      %p185 = scmp.lt.s32.totalorder %s184, 47
      %s186 = scalar_select %p185, %s184, 47
      %s187 = smul.addr %s186, 4
      %s188 = scalar_lea.vmem %s4, %s187
      %s189 = smul.u32 16, %s15
      %p190 = scmp.lt.s32.totalorder %s189, 47
      %s191 = scalar_select %p190, %s189, 47
      %s192 = smul.addr %s191, 8
      %s193 = scalar_lea.vmem %s0, %s192
      %s194 = smul.u32 16, %s15
      %s195 = smul.u32 16, %s15
      %p196 = scmp.lt.s32.totalorder %s195, 47
      %s197 = scalar_select %p196, %s195, 47
      %s198 = smul.addr %s197, 4
      %s199 = scalar_lea.vmem %s4, %s198
      %s200 = smul.u32 16, %s15
      %v201 = vld [vmem:[%s193] sm:$0xff]
      %v202 = vld [vmem:[%s193 + $0x8] sm:$0xff]
      %v203 = vld [vmem:[%s193 + $0x10] sm:$0xff]
      %v204 = vld [vmem:[%s193 + $0x18] sm:$0xff]
      %v205 = vld [vmem:[%s193 + $0x20] sm:$0xff]
      %v206 = vld [vmem:[%s193 + $0x28] sm:$0xff]
      %v207 = vld [vmem:[%s193 + $0x30] sm:$0xff]
      %v208 = vld [vmem:[%s193 + $0x38] sm:$0xff]
      %v209 = vld [vmem:[%s193 + $0x40] sm:$0xff]
      %v210 = vld [vmem:[%s193 + $0x48] sm:$0xff]
      %v211 = vld [vmem:[%s193 + $0x50] sm:$0xff]
      %v212 = vld [vmem:[%s193 + $0x58] sm:$0xff]
      %v213 = vld [vmem:[%s193 + $0x60] sm:$0xff]
      %v214 = vld [vmem:[%s193 + $0x68] sm:$0xff]
      %v215 = vld [vmem:[%s193 + $0x70] sm:$0xff]
      %v216 = vld [vmem:[%s193 + $0x78] sm:$0xff]
      %v217 = vld [vmem:[%s1] sm:$0x1]
      %v219 = vperm.slane %v217, 0
      %v221 = vmul.f32 %v201, %v219
      %v222 = vmul.f32 %v202, %v219
      %v223 = vmul.f32 %v203, %v219
      %v224 = vmul.f32 %v204, %v219
      %v225 = vmul.f32 %v205, %v219
      %v226 = vmul.f32 %v206, %v219
      %v227 = vmul.f32 %v207, %v219
      %v228 = vmul.f32 %v208, %v219
      %v229 = vmul.f32 %v209, %v219
      %v230 = vmul.f32 %v210, %v219
      %v231 = vmul.f32 %v211, %v219
      %v232 = vmul.f32 %v212, %v219
      %v233 = vmul.f32 %v213, %v219
      %v234 = vmul.f32 %v214, %v219
      %v235 = vmul.f32 %v215, %v219
      %v236 = vmul.f32 %v216, %v219
      %v237 = vld [vmem:[%s2] sm:$0x1]
      %v239 = vperm.slane %v237, 0
      %v241 = vadd.f32 %v221, %v239
      %v242 = vadd.f32 %v222, %v239
      %v243 = vadd.f32 %v223, %v239
      %v244 = vadd.f32 %v224, %v239
      %v245 = vadd.f32 %v225, %v239
      %v246 = vadd.f32 %v226, %v239
      %v247 = vadd.f32 %v227, %v239
      %v248 = vadd.f32 %v228, %v239
      %v249 = vadd.f32 %v229, %v239
      %v250 = vadd.f32 %v230, %v239
      %v251 = vadd.f32 %v231, %v239
      %v252 = vadd.f32 %v232, %v239
      %v253 = vadd.f32 %v233, %v239
      %v254 = vadd.f32 %v234, %v239
      %v255 = vadd.f32 %v235, %v239
      %v256 = vadd.f32 %v236, %v239
      %v257 = vmax.f32 %v241, 0.0
      %v258 = vmax.f32 %v242, 0.0
      %v259 = vmax.f32 %v243, 0.0
      %v260 = vmax.f32 %v244, 0.0
      %v261 = vmax.f32 %v245, 0.0
      %v262 = vmax.f32 %v246, 0.0
      %v263 = vmax.f32 %v247, 0.0
      %v264 = vmax.f32 %v248, 0.0
      %v265 = vmax.f32 %v249, 0.0
      %v266 = vmax.f32 %v250, 0.0
      %v267 = vmax.f32 %v251, 0.0
      %v268 = vmax.f32 %v252, 0.0
      %v269 = vmax.f32 %v253, 0.0
      %v270 = vmax.f32 %v254, 0.0
      %v271 = vmax.f32 %v255, 0.0
      %v272 = vmax.f32 %v256, 0.0
      %v273 = vpack.c.bf16 %v258, %v257
      %v274 = vpack.c.bf16 %v260, %v259
      %v275 = vpack.c.bf16 %v262, %v261
      %v276 = vpack.c.bf16 %v264, %v263
      %v277 = vpack.c.bf16 %v266, %v265
      %v278 = vpack.c.bf16 %v268, %v267
      %v279 = vpack.c.bf16 %v270, %v269
      %v280 = vpack.c.bf16 %v272, %v271
      %v281 = vld [vmem:[%s3] sm:$0xf]
      %v282 = vld [vmem:[%s3 + $0x4] sm:$0xf]
      %v283 = vld [vmem:[%s3 + $0x8] sm:$0xf]
      %v284 = vld [vmem:[%s3 + $0xc] sm:$0xf]
      %v285 = vld [vmem:[%s3 + $0x10] sm:$0xf]
      %v286 = vld [vmem:[%s3 + $0x14] sm:$0xf]
      %v287 = vld [vmem:[%s3 + $0x18] sm:$0xf]
      %v288 = vld [vmem:[%s3 + $0x1c] sm:$0xf]
      %v289 = vld [vmem:[%s3 + $0x20] sm:$0xf]
      %v290 = vld [vmem:[%s3 + $0x24] sm:$0xf]
      %v291 = vld [vmem:[%s3 + $0x28] sm:$0xf]
      %v292 = vld [vmem:[%s3 + $0x2c] sm:$0xf]
      %v293 = vld [vmem:[%s3 + $0x30] sm:$0xf]
      %v294 = vld [vmem:[%s3 + $0x34] sm:$0xf]
      %v295 = vld [vmem:[%s3 + $0x38] sm:$0xf]
      %v296 = vld [vmem:[%s3 + $0x3c] sm:$0xf]
      %v313 = vunpack.c.l.b16 %v281
      %v314 = vunpack.c.l.b16 %v282
      %v315 = vunpack.c.l.b16 %v283
      %v316 = vunpack.c.l.b16 %v284
      %v317 = vunpack.c.l.b16 %v285
      %v318 = vunpack.c.l.b16 %v286
      %v319 = vunpack.c.l.b16 %v287
      %v320 = vunpack.c.l.b16 %v288
      %v321 = vunpack.c.l.b16 %v289
      %v322 = vunpack.c.l.b16 %v290
      %v323 = vunpack.c.l.b16 %v291
      %v324 = vunpack.c.l.b16 %v292
      %v325 = vunpack.c.l.b16 %v293
      %v326 = vunpack.c.l.b16 %v294
      %v327 = vunpack.c.l.b16 %v295
      %v328 = vunpack.c.l.b16 %v296
      %v329 = vpack.c.b16 %v314, %v313
      %v330 = vpack.c.b16 %v316, %v315
      %v331 = vpack.c.b16 %v318, %v317
      %v332 = vpack.c.b16 %v320, %v319
      %v333 = vpack.c.b16 %v322, %v321
      %v334 = vpack.c.b16 %v324, %v323
      %v335 = vpack.c.b16 %v326, %v325
      %v336 = vpack.c.b16 %v328, %v327
      %345 = vmatpush.bf16.msra.mxu0 %v336
      %346 = vmatpush.bf16.msra.mxu0 %v335
      %347 = vmatpush.bf16.msra.mxu0 %v334
      %348 = vmatpush.bf16.msra.mxu0 %v333
      %349 = vmatpush.bf16.msra.mxu0 %v332
      %350 = vmatpush.bf16.msra.mxu0 %v331
      %351 = vmatpush.bf16.msra.mxu0 %v330
      %352 = vmatpush.bf16.msra.mxu0 %v329
      %353 = vmatmul.bf16.gmra.mxu0 %v273
      %v354 = vpop.f32.mrf.mxu0
      %v355 = vadd.f32 0.0, %v354
      %v356 = vpop.f32.mrf.mxu0
      %v357 = vadd.f32 0.0, %v356
      %358 = vmatmul.bf16.gmra.mxu0 %v274
      %v359 = vpop.f32.mrf.mxu0
      %v360 = vadd.f32 0.0, %v359
      %v361 = vpop.f32.mrf.mxu0
      %v362 = vadd.f32 0.0, %v361
      %363 = vmatmul.bf16.gmra.mxu0 %v275
      %v364 = vpop.f32.mrf.mxu0
      %v365 = vadd.f32 0.0, %v364
      %v366 = vpop.f32.mrf.mxu0
      %v367 = vadd.f32 0.0, %v366
      %368 = vmatmul.bf16.gmra.mxu0 %v276
      %v369 = vpop.f32.mrf.mxu0
      %v370 = vadd.f32 0.0, %v369
      %v371 = vpop.f32.mrf.mxu0
      %v372 = vadd.f32 0.0, %v371
      %373 = vmatmul.bf16.gmra.mxu0 %v277
      %v374 = vpop.f32.mrf.mxu0
      %v375 = vadd.f32 0.0, %v374
      %v376 = vpop.f32.mrf.mxu0
      %v377 = vadd.f32 0.0, %v376
      %378 = vmatmul.bf16.gmra.mxu0 %v278
      %v379 = vpop.f32.mrf.mxu0
      %v380 = vadd.f32 0.0, %v379
      %v381 = vpop.f32.mrf.mxu0
      %v382 = vadd.f32 0.0, %v381
      %383 = vmatmul.bf16.gmra.mxu0 %v279
      %v384 = vpop.f32.mrf.mxu0
      %v385 = vadd.f32 0.0, %v384
      %v386 = vpop.f32.mrf.mxu0
      %v387 = vadd.f32 0.0, %v386
      %388 = vmatmul.bf16.gmra.mxu0 %v280
      %v389 = vpop.f32.mrf.mxu0
      %v390 = vadd.f32 0.0, %v389
      %v391 = vpop.f32.mrf.mxu0
      %v392 = vadd.f32 0.0, %v391
      %393 = vdwg.mxu0
      %v394 = vpack.c.bf16 %v355, %v355
      %v395 = vpack.c.bf16 %v357, %v357
      %v396 = vpack.c.bf16 %v360, %v360
      %v397 = vpack.c.bf16 %v362, %v362
      %v398 = vpack.c.bf16 %v365, %v365
      %v399 = vpack.c.bf16 %v367, %v367
      %v400 = vpack.c.bf16 %v370, %v370
      %v401 = vpack.c.bf16 %v372, %v372
      %v402 = vpack.c.bf16 %v375, %v375
      %v403 = vpack.c.bf16 %v377, %v377
      %v404 = vpack.c.bf16 %v380, %v380
      %v405 = vpack.c.bf16 %v382, %v382
      %v406 = vpack.c.bf16 %v385, %v385
      %v407 = vpack.c.bf16 %v387, %v387
      %v408 = vpack.c.bf16 %v390, %v390
      %v409 = vpack.c.bf16 %v392, %v392
      %410 = vst [vmem:[%s199] sm:$0xf] %v394
      %411 = vst [vmem:[%s199 + $0x4] sm:$0xf] %v395
      %412 = vst [vmem:[%s199 + $0x8] sm:$0xf] %v396
      %413 = vst [vmem:[%s199 + $0xc] sm:$0xf] %v397
      %414 = vst [vmem:[%s199 + $0x10] sm:$0xf] %v398
      %415 = vst [vmem:[%s199 + $0x14] sm:$0xf] %v399
      %416 = vst [vmem:[%s199 + $0x18] sm:$0xf] %v400
      %417 = vst [vmem:[%s199 + $0x1c] sm:$0xf] %v401
      %418 = vst [vmem:[%s199 + $0x20] sm:$0xf] %v402
      %419 = vst [vmem:[%s199 + $0x24] sm:$0xf] %v403
      %420 = vst [vmem:[%s199 + $0x28] sm:$0xf] %v404
      %421 = vst [vmem:[%s199 + $0x2c] sm:$0xf] %v405
      %422 = vst [vmem:[%s199 + $0x30] sm:$0xf] %v406
      %423 = vst [vmem:[%s199 + $0x34] sm:$0xf] %v407
      %424 = vst [vmem:[%s199 + $0x38] sm:$0xf] %v408
      %425 = vst [vmem:[%s199 + $0x3c] sm:$0xf] %v409
      %s426 = smul.u32 16, %s15
      %p427 = scmp.lt.s32.totalorder %s426, 47
      %s428 = scalar_select %p427, %s426, 47
      %s429 = smul.addr %s428, 4
      %s430 = scalar_lea.vmem %s4, %s429
      // Predicated region
      $region37: #{gcn_encoder.7} parent=35 // pred_check
        %p431 = pneg %p122
      $region38: #{gcn_encoder.7} parent=35 // pred_check_branch
        %433 = sbr.rel (%p431) target = $region40
      $region39: #{gcn_encoder.7} parent=35 // pred_region
        %s434 = smul.u32 16, %s15
      $region40: #{gcn_encoder.7} parent=35 // pred_fallthru
        _
    $region36: #{gcn_encoder.7} parent=5 // pred_fallthru
      _
    %p435 = scmp.le.s32.totalorder 2, %s10
    // Predicated region
    $region41: #{gcn_encoder.7} parent=5 // pred_check
      %p436 = pneg %p435
    $region42: #{gcn_encoder.7} parent=5 // pred_check_branch
      %438 = sbr.rel (%p436) target = $region44
    $region43: #{gcn_encoder.7} parent=5 // pred_region
      %s439 = ssub.s32 %s10, 2
      // Predicated region
      $region45: #{gcn_encoder.7} parent=43 // pred_check
        %p440 = pneg %p128
      $region46: #{gcn_encoder.7} parent=43 // pred_check_branch
        %442 = sbr.rel (%p440) target = $region48
      $region47: #{gcn_encoder.7} parent=43 // pred_region
        %s443 = smul.u32 16, %s16
        %p444 = scmp.lt.s32.totalorder %s443, 47
        %s445 = scalar_select %p444, %s443, 47
        %s446 = smul.addr %s445, 4
        %s447 = scalar_lea.vmem %s4, %s446
      $region48: #{gcn_encoder.7} parent=43 // pred_fallthru
        _
    $region44: #{gcn_encoder.7} parent=5 // pred_fallthru
      _
  $region6: #{gcn_encoder.7} parent=0 // loop_footer
    %s14 = sadd.s32 1, %s10
  $region7: #{gcn_encoder.7} parent=0 // loop_footer_branch
    %9 = sbr.rel target = $region3
  $region8: #{gcn_encoder.7} parent=0 // loop_exit
    _

// kernel: gcn_encoder.5
$region0: #{gcn_encoder.5}
  #allocation0 [shape = 'u32[]', space=smem, size = 0x4, offset = 0x4, fixed_abs, tag = 'smem constant byte address 0x4 - core index']
  #allocation1 [shape = 'u32[72,128]{1,0:T(1,128)}', space=vmem, size = 0x9000, scoped, tag = 'internal scratch']
  %s0 = inlined_call_operand.vmem [shape: f32[384,128], index: 0, kind: input, shape index: {}]
  %s1 = inlined_call_operand.vmem [shape: f32[1,128], index: 1, kind: input, shape index: {}]
  %s2 = inlined_call_operand.vmem [shape: f32[1,128], index: 2, kind: input, shape index: {}]
  %s3 = inlined_call_operand.vmem [shape: bf16[128,128], index: 3, kind: input, shape index: {}]
  %s4 = inlined_call_operand.vmem [shape: bf16[384,128], index: 4, kind: output, shape index: {}]
  %s5 = sld [smem:[#allocation0]]
  $region49: #{gcn_encoder.5} parent=0
    _
  %s7 = ssub.s32 1, %s5
  %s8 = scalar_select 0, %s7, %s5
  loop: start=0, step=1, limit=5
  $region2: #{gcn_encoder.5} parent=0 // loop_pre_header
    _
  $region3: #{gcn_encoder.5} parent=0 // loop_header
    %s10 = sphi 0, %s14
    %p11 = scmp.ge.s32.totalorder %s10, 5
    %s20 = sphi 0, %s22
    %s23 = sphi 0, %s20
    %s24 = sphi 0, %s23
    %s40 = sphi 0, %s24
    %s44 = sphi 0, %s44
    %s46 = sphi 0, %s44
    %s47 = sphi 0, %s46
    %s61 = sphi 0, %s47
    %s65 = sphi 0, %s65
    %s67 = sphi 0, %s65
    %s68 = sphi 0, %s67
    %s82 = sphi 0, %s68
    %s86 = sphi 0, %s86
    %s88 = sphi 0, %s86
    %s89 = sphi 0, %s88
    %s103 = sphi 0, %s89
    %s109 = sphi 0, %s111
    %s112 = sphi 0, %s109
    %s113 = sphi 0, %s112
    %s129 = sphi 0, %s113
  $region4: #{gcn_encoder.5} parent=0 // loop_header_branch
    %13 = sbr.rel (%p11) target = $region8
  $region5: #{gcn_encoder.5} parent=0 // loop_body
    %s15 = ssub.s32 %s10, 1
    %s16 = ssub.s32 %s10, 2
    %s17 = sadd.s32 %s10, 1
    %s18 = ssub.s32 %s10, %s17
    %p19 = scmp.eq.s32.totalorder %s18, 0
    %s21 = sadd.s32 %s20, 1
    %s22 = scalar_select %p19, %s20, %s21
    %p25 = pneg %p19
    %p26 = scmp.eq.s32.totalorder %s10, 2
    %p27 = por %p25, %p26
    %p28 = scmp.ne.s32.totalorder %s20, %s23
    %p29 = scmp.eq.s32.totalorder %s10, 0
    %p30 = por %p28, %p29
    %p31 = scmp.ne.s32.totalorder %s20, %s23
    %p32 = scmp.eq.s32.totalorder %s15, 2
    %p33 = por %p31, %p32
    %p34 = scmp.ne.s32.totalorder %s23, %s24
    %p35 = scmp.eq.s32.totalorder %s15, 0
    %p36 = por %p34, %p35
    %p37 = scmp.ne.s32.totalorder %s23, %s24
    %p38 = scmp.eq.s32.totalorder %s16, 2
    %p39 = por %p37, %p38
    %p41 = scmp.ne.s32.totalorder %s24, %s40
    %p42 = scmp.eq.s32.totalorder %s16, 0
    %p43 = por %p41, %p42
    %s45 = sadd.s32 %s44, 1
    %p48 = scmp.eq.s32.totalorder %s10, 2
    %p49 = scmp.ne.s32.totalorder %s44, %s46
    %p50 = scmp.eq.s32.totalorder %s10, 0
    %p51 = por %p49, %p50
    %p52 = scmp.ne.s32.totalorder %s44, %s46
    %p53 = scmp.eq.s32.totalorder %s15, 2
    %p54 = por %p52, %p53
    %p55 = scmp.ne.s32.totalorder %s46, %s47
    %p56 = scmp.eq.s32.totalorder %s15, 0
    %p57 = por %p55, %p56
    %p58 = scmp.ne.s32.totalorder %s46, %s47
    %p59 = scmp.eq.s32.totalorder %s16, 2
    %p60 = por %p58, %p59
    %p62 = scmp.ne.s32.totalorder %s47, %s61
    %p63 = scmp.eq.s32.totalorder %s16, 0
    %p64 = por %p62, %p63
    %s66 = sadd.s32 %s65, 1
    %p69 = scmp.eq.s32.totalorder %s10, 2
    %p70 = scmp.ne.s32.totalorder %s65, %s67
    %p71 = scmp.eq.s32.totalorder %s10, 0
    %p72 = por %p70, %p71
    %p73 = scmp.ne.s32.totalorder %s65, %s67
    %p74 = scmp.eq.s32.totalorder %s15, 2
    %p75 = por %p73, %p74
    %p76 = scmp.ne.s32.totalorder %s67, %s68
    %p77 = scmp.eq.s32.totalorder %s15, 0
    %p78 = por %p76, %p77
    %p79 = scmp.ne.s32.totalorder %s67, %s68
    %p80 = scmp.eq.s32.totalorder %s16, 2
    %p81 = por %p79, %p80
    %p83 = scmp.ne.s32.totalorder %s68, %s82
    %p84 = scmp.eq.s32.totalorder %s16, 0
    %p85 = por %p83, %p84
    %s87 = sadd.s32 %s86, 1
    %p90 = scmp.eq.s32.totalorder %s10, 2
    %p91 = scmp.ne.s32.totalorder %s86, %s88
    %p92 = scmp.eq.s32.totalorder %s10, 0
    %p93 = por %p91, %p92
    %p94 = scmp.ne.s32.totalorder %s86, %s88
    %p95 = scmp.eq.s32.totalorder %s15, 2
    %p96 = por %p94, %p95
    %p97 = scmp.ne.s32.totalorder %s88, %s89
    %p98 = scmp.eq.s32.totalorder %s15, 0
    %p99 = por %p97, %p98
    %p100 = scmp.ne.s32.totalorder %s88, %s89
    %p101 = scmp.eq.s32.totalorder %s16, 2
    %p102 = por %p100, %p101
    %p104 = scmp.ne.s32.totalorder %s89, %s103
    %p105 = scmp.eq.s32.totalorder %s16, 0
    %p106 = por %p104, %p105
    %s107 = ssub.s32 %s10, %s17
    %p108 = scmp.eq.s32.totalorder %s107, 0
    %s110 = sadd.s32 %s109, 1
    %s111 = scalar_select %p108, %s109, %s110
    %p114 = pneg %p108
    %p115 = scmp.eq.s32.totalorder %s10, 2
    %p116 = por %p114, %p115
    %p117 = scmp.ne.s32.totalorder %s109, %s112
    %p118 = scmp.eq.s32.totalorder %s10, 0
    %p119 = por %p117, %p118
    %p120 = scmp.ne.s32.totalorder %s109, %s112
    %p121 = scmp.eq.s32.totalorder %s15, 2
    %p122 = por %p120, %p121
    %p123 = scmp.ne.s32.totalorder %s112, %s113
    %p124 = scmp.eq.s32.totalorder %s15, 0
    %p125 = por %p123, %p124
    %p126 = scmp.ne.s32.totalorder %s112, %s113
    %p127 = scmp.eq.s32.totalorder %s16, 2
    %p128 = por %p126, %p127
    %p130 = scmp.ne.s32.totalorder %s113, %s129
    %p131 = scmp.eq.s32.totalorder %s16, 0
    %p132 = por %p130, %p131
    %p133 = scmp.le.s32.totalorder 1, %s10
    %p134 = scmp.lt.s32.totalorder %s10, 4
    %p135 = pnand %p133, %p134
    %p136 = pneg %p135
    // Predicated region
    $region9: #{gcn_encoder.5} parent=5 // pred_check
      _
    $region10: #{gcn_encoder.5} parent=5 // pred_check_branch
      %138 = sbr.rel (%p135) target = $region12
    $region11: #{gcn_encoder.5} parent=5 // pred_region
      %s139 = ssub.s32 %s10, 1
      // Predicated region
      $region13: #{gcn_encoder.5} parent=11 // pred_check
        %p140 = pneg %p57
      $region14: #{gcn_encoder.5} parent=11 // pred_check_branch
        %142 = sbr.rel (%p140) target = $region16
      $region15: #{gcn_encoder.5} parent=11 // pred_region
        _
      $region16: #{gcn_encoder.5} parent=11 // pred_fallthru
        _
      // Predicated region
      $region17: #{gcn_encoder.5} parent=11 // pred_check
        %p143 = pneg %p78
      $region18: #{gcn_encoder.5} parent=11 // pred_check_branch
        %145 = sbr.rel (%p143) target = $region20
      $region19: #{gcn_encoder.5} parent=11 // pred_region
        _
      $region20: #{gcn_encoder.5} parent=11 // pred_fallthru
        _
      // Predicated region
      $region21: #{gcn_encoder.5} parent=11 // pred_check
        %p146 = pneg %p99
      $region22: #{gcn_encoder.5} parent=11 // pred_check_branch
        %148 = sbr.rel (%p146) target = $region24
      $region23: #{gcn_encoder.5} parent=11 // pred_region
        _
      $region24: #{gcn_encoder.5} parent=11 // pred_fallthru
        _
    $region12: #{gcn_encoder.5} parent=5 // pred_fallthru
      _
    %p149 = scmp.lt.s32.totalorder %s10, 3
    // Predicated region
    $region25: #{gcn_encoder.5} parent=5 // pred_check
      %p150 = pneg %p149
    $region26: #{gcn_encoder.5} parent=5 // pred_check_branch
      %152 = sbr.rel (%p150) target = $region28
    $region27: #{gcn_encoder.5} parent=5 // pred_region
      // Predicated region
      $region29: #{gcn_encoder.5} parent=27 // pred_check
        %p153 = pneg %p30
      $region30: #{gcn_encoder.5} parent=27 // pred_check_branch
        %155 = sbr.rel (%p153) target = $region32
      $region31: #{gcn_encoder.5} parent=27 // pred_region
        %s156 = smul.u32 16, %s10
        %p157 = scmp.lt.s32.totalorder %s156, 47
        %s158 = scalar_select %p157, %s156, 47
        %s159 = smul.addr %s158, 8
        %s160 = scalar_lea.vmem %s0, %s159
        %s161 = smul.u32 16, %s10
      $region32: #{gcn_encoder.5} parent=27 // pred_fallthru
        _
    $region28: #{gcn_encoder.5} parent=5 // pred_fallthru
      _
    %p162 = scmp.le.s32.totalorder 1, %s10
    %p163 = scmp.lt.s32.totalorder %s10, 4
    %p164 = pnand %p162, %p163
    %p165 = pneg %p164
    // Predicated region
    $region33: #{gcn_encoder.5} parent=5 // pred_check
      _
    $region34: #{gcn_encoder.5} parent=5 // pred_check_branch
      %167 = sbr.rel (%p164) target = $region36
    $region35: #{gcn_encoder.5} parent=5 // pred_region
      %s168 = ssub.s32 %s10, 1
      %s169 = smul.u32 16, %s15
      %p170 = scmp.lt.s32.totalorder %s169, 47
      %s171 = scalar_select %p170, %s169, 47
      %s172 = smul.addr %s171, 8
      %s173 = scalar_lea.vmem %s0, %s172
      %p174 = pneg %p36
      %p175 = pneg %p33
      %p176 = pneg %p57
      %p177 = pneg %p54
      %p178 = pneg %p78
      %p179 = pneg %p75
      %p180 = pneg %p99
      %p181 = pneg %p96
      %p182 = pneg %p125
      %p183 = pneg %p122
      %s184 = smul.u32 16, %s15
      %p185 = scmp.lt.s32.totalorder %s184, 47
      %s186 = scalar_select %p185, %s184, 47
      %s187 = smul.addr %s186, 4
      %s188 = scalar_lea.vmem %s4, %s187
      %s189 = smul.u32 16, %s15
      %p190 = scmp.lt.s32.totalorder %s189, 47
      %s191 = scalar_select %p190, %s189, 47
      %s192 = smul.addr %s191, 8
      %s193 = scalar_lea.vmem %s0, %s192
      %s194 = smul.u32 16, %s15
      %s195 = smul.u32 16, %s15
      %p196 = scmp.lt.s32.totalorder %s195, 47
      %s197 = scalar_select %p196, %s195, 47
      %s198 = smul.addr %s197, 4
      %s199 = scalar_lea.vmem %s4, %s198
      %s200 = smul.u32 16, %s15
      %v201 = vld [vmem:[%s193] sm:$0xff]
      %v202 = vld [vmem:[%s193 + $0x8] sm:$0xff]
      %v203 = vld [vmem:[%s193 + $0x10] sm:$0xff]
      %v204 = vld [vmem:[%s193 + $0x18] sm:$0xff]
      %v205 = vld [vmem:[%s193 + $0x20] sm:$0xff]
      %v206 = vld [vmem:[%s193 + $0x28] sm:$0xff]
      %v207 = vld [vmem:[%s193 + $0x30] sm:$0xff]
      %v208 = vld [vmem:[%s193 + $0x38] sm:$0xff]
      %v209 = vld [vmem:[%s193 + $0x40] sm:$0xff]
      %v210 = vld [vmem:[%s193 + $0x48] sm:$0xff]
      %v211 = vld [vmem:[%s193 + $0x50] sm:$0xff]
      %v212 = vld [vmem:[%s193 + $0x58] sm:$0xff]
      %v213 = vld [vmem:[%s193 + $0x60] sm:$0xff]
      %v214 = vld [vmem:[%s193 + $0x68] sm:$0xff]
      %v215 = vld [vmem:[%s193 + $0x70] sm:$0xff]
      %v216 = vld [vmem:[%s193 + $0x78] sm:$0xff]
      %v217 = vld [vmem:[%s1] sm:$0x1]
      %v219 = vperm.slane %v217, 0
      %v221 = vmul.f32 %v201, %v219
      %v222 = vmul.f32 %v202, %v219
      %v223 = vmul.f32 %v203, %v219
      %v224 = vmul.f32 %v204, %v219
      %v225 = vmul.f32 %v205, %v219
      %v226 = vmul.f32 %v206, %v219
      %v227 = vmul.f32 %v207, %v219
      %v228 = vmul.f32 %v208, %v219
      %v229 = vmul.f32 %v209, %v219
      %v230 = vmul.f32 %v210, %v219
      %v231 = vmul.f32 %v211, %v219
      %v232 = vmul.f32 %v212, %v219
      %v233 = vmul.f32 %v213, %v219
      %v234 = vmul.f32 %v214, %v219
      %v235 = vmul.f32 %v215, %v219
      %v236 = vmul.f32 %v216, %v219
      %v237 = vld [vmem:[%s2] sm:$0x1]
      %v239 = vperm.slane %v237, 0
      %v241 = vadd.f32 %v221, %v239
      %v242 = vadd.f32 %v222, %v239
      %v243 = vadd.f32 %v223, %v239
      %v244 = vadd.f32 %v224, %v239
      %v245 = vadd.f32 %v225, %v239
      %v246 = vadd.f32 %v226, %v239
      %v247 = vadd.f32 %v227, %v239
      %v248 = vadd.f32 %v228, %v239
      %v249 = vadd.f32 %v229, %v239
      %v250 = vadd.f32 %v230, %v239
      %v251 = vadd.f32 %v231, %v239
      %v252 = vadd.f32 %v232, %v239
      %v253 = vadd.f32 %v233, %v239
      %v254 = vadd.f32 %v234, %v239
      %v255 = vadd.f32 %v235, %v239
      %v256 = vadd.f32 %v236, %v239
      %v257 = vpack.c.bf16 %v242, %v241
      %v258 = vpack.c.bf16 %v244, %v243
      %v259 = vpack.c.bf16 %v246, %v245
      %v260 = vpack.c.bf16 %v248, %v247
      %v261 = vpack.c.bf16 %v250, %v249
      %v262 = vpack.c.bf16 %v252, %v251
      %v263 = vpack.c.bf16 %v254, %v253
      %v264 = vpack.c.bf16 %v256, %v255
      %v265 = vld [vmem:[%s3] sm:$0xf]
      %v266 = vld [vmem:[%s3 + $0x4] sm:$0xf]
      %v267 = vld [vmem:[%s3 + $0x8] sm:$0xf]
      %v268 = vld [vmem:[%s3 + $0xc] sm:$0xf]
      %v269 = vld [vmem:[%s3 + $0x10] sm:$0xf]
      %v270 = vld [vmem:[%s3 + $0x14] sm:$0xf]
      %v271 = vld [vmem:[%s3 + $0x18] sm:$0xf]
      %v272 = vld [vmem:[%s3 + $0x1c] sm:$0xf]
      %v273 = vld [vmem:[%s3 + $0x20] sm:$0xf]
      %v274 = vld [vmem:[%s3 + $0x24] sm:$0xf]
      %v275 = vld [vmem:[%s3 + $0x28] sm:$0xf]
      %v276 = vld [vmem:[%s3 + $0x2c] sm:$0xf]
      %v277 = vld [vmem:[%s3 + $0x30] sm:$0xf]
      %v278 = vld [vmem:[%s3 + $0x34] sm:$0xf]
      %v279 = vld [vmem:[%s3 + $0x38] sm:$0xf]
      %v280 = vld [vmem:[%s3 + $0x3c] sm:$0xf]
      %v297 = vunpack.c.l.b16 %v265
      %v298 = vunpack.c.l.b16 %v266
      %v299 = vunpack.c.l.b16 %v267
      %v300 = vunpack.c.l.b16 %v268
      %v301 = vunpack.c.l.b16 %v269
      %v302 = vunpack.c.l.b16 %v270
      %v303 = vunpack.c.l.b16 %v271
      %v304 = vunpack.c.l.b16 %v272
      %v305 = vunpack.c.l.b16 %v273
      %v306 = vunpack.c.l.b16 %v274
      %v307 = vunpack.c.l.b16 %v275
      %v308 = vunpack.c.l.b16 %v276
      %v309 = vunpack.c.l.b16 %v277
      %v310 = vunpack.c.l.b16 %v278
      %v311 = vunpack.c.l.b16 %v279
      %v312 = vunpack.c.l.b16 %v280
      %v313 = vpack.c.b16 %v298, %v297
      %v314 = vpack.c.b16 %v300, %v299
      %v315 = vpack.c.b16 %v302, %v301
      %v316 = vpack.c.b16 %v304, %v303
      %v317 = vpack.c.b16 %v306, %v305
      %v318 = vpack.c.b16 %v308, %v307
      %v319 = vpack.c.b16 %v310, %v309
      %v320 = vpack.c.b16 %v312, %v311
      %329 = vmatpush.bf16.msra.mxu0 %v320
      %330 = vmatpush.bf16.msra.mxu0 %v319
      %331 = vmatpush.bf16.msra.mxu0 %v318
      %332 = vmatpush.bf16.msra.mxu0 %v317
      %333 = vmatpush.bf16.msra.mxu0 %v316
      %334 = vmatpush.bf16.msra.mxu0 %v315
      %335 = vmatpush.bf16.msra.mxu0 %v314
      %336 = vmatpush.bf16.msra.mxu0 %v313
      %337 = vmatmul.bf16.gmra.mxu0 %v257
      %v338 = vpop.f32.mrf.mxu0
      %v339 = vadd.f32 0.0, %v338
      %v340 = vpop.f32.mrf.mxu0
      %v341 = vadd.f32 0.0, %v340
      %342 = vmatmul.bf16.gmra.mxu0 %v258
      %v343 = vpop.f32.mrf.mxu0
      %v344 = vadd.f32 0.0, %v343
      %v345 = vpop.f32.mrf.mxu0
      %v346 = vadd.f32 0.0, %v345
      %347 = vmatmul.bf16.gmra.mxu0 %v259
      %v348 = vpop.f32.mrf.mxu0
      %v349 = vadd.f32 0.0, %v348
      %v350 = vpop.f32.mrf.mxu0
      %v351 = vadd.f32 0.0, %v350
      %352 = vmatmul.bf16.gmra.mxu0 %v260
      %v353 = vpop.f32.mrf.mxu0
      %v354 = vadd.f32 0.0, %v353
      %v355 = vpop.f32.mrf.mxu0
      %v356 = vadd.f32 0.0, %v355
      %357 = vmatmul.bf16.gmra.mxu0 %v261
      %v358 = vpop.f32.mrf.mxu0
      %v359 = vadd.f32 0.0, %v358
      %v360 = vpop.f32.mrf.mxu0
      %v361 = vadd.f32 0.0, %v360
      %362 = vmatmul.bf16.gmra.mxu0 %v262
      %v363 = vpop.f32.mrf.mxu0
      %v364 = vadd.f32 0.0, %v363
      %v365 = vpop.f32.mrf.mxu0
      %v366 = vadd.f32 0.0, %v365
      %367 = vmatmul.bf16.gmra.mxu0 %v263
      %v368 = vpop.f32.mrf.mxu0
      %v369 = vadd.f32 0.0, %v368
      %v370 = vpop.f32.mrf.mxu0
      %v371 = vadd.f32 0.0, %v370
      %372 = vmatmul.bf16.gmra.mxu0 %v264
      %v373 = vpop.f32.mrf.mxu0
      %v374 = vadd.f32 0.0, %v373
      %v375 = vpop.f32.mrf.mxu0
      %v376 = vadd.f32 0.0, %v375
      %377 = vdwg.mxu0
      %v378 = vpack.c.bf16 %v339, %v339
      %v379 = vpack.c.bf16 %v341, %v341
      %v380 = vpack.c.bf16 %v344, %v344
      %v381 = vpack.c.bf16 %v346, %v346
      %v382 = vpack.c.bf16 %v349, %v349
      %v383 = vpack.c.bf16 %v351, %v351
      %v384 = vpack.c.bf16 %v354, %v354
      %v385 = vpack.c.bf16 %v356, %v356
      %v386 = vpack.c.bf16 %v359, %v359
      %v387 = vpack.c.bf16 %v361, %v361
      %v388 = vpack.c.bf16 %v364, %v364
      %v389 = vpack.c.bf16 %v366, %v366
      %v390 = vpack.c.bf16 %v369, %v369
      %v391 = vpack.c.bf16 %v371, %v371
      %v392 = vpack.c.bf16 %v374, %v374
      %v393 = vpack.c.bf16 %v376, %v376
      %394 = vst [vmem:[%s199] sm:$0xf] %v378
      %395 = vst [vmem:[%s199 + $0x4] sm:$0xf] %v379
      %396 = vst [vmem:[%s199 + $0x8] sm:$0xf] %v380
      %397 = vst [vmem:[%s199 + $0xc] sm:$0xf] %v381
      %398 = vst [vmem:[%s199 + $0x10] sm:$0xf] %v382
      %399 = vst [vmem:[%s199 + $0x14] sm:$0xf] %v383
      %400 = vst [vmem:[%s199 + $0x18] sm:$0xf] %v384
      %401 = vst [vmem:[%s199 + $0x1c] sm:$0xf] %v385
      %402 = vst [vmem:[%s199 + $0x20] sm:$0xf] %v386
      %403 = vst [vmem:[%s199 + $0x24] sm:$0xf] %v387
      %404 = vst [vmem:[%s199 + $0x28] sm:$0xf] %v388
      %405 = vst [vmem:[%s199 + $0x2c] sm:$0xf] %v389
      %406 = vst [vmem:[%s199 + $0x30] sm:$0xf] %v390
      %407 = vst [vmem:[%s199 + $0x34] sm:$0xf] %v391
      %408 = vst [vmem:[%s199 + $0x38] sm:$0xf] %v392
      %409 = vst [vmem:[%s199 + $0x3c] sm:$0xf] %v393
      %s410 = smul.u32 16, %s15
      %p411 = scmp.lt.s32.totalorder %s410, 47
      %s412 = scalar_select %p411, %s410, 47
      %s413 = smul.addr %s412, 4
      %s414 = scalar_lea.vmem %s4, %s413
      // Predicated region
      $region37: #{gcn_encoder.5} parent=35 // pred_check
        %p415 = pneg %p122
      $region38: #{gcn_encoder.5} parent=35 // pred_check_branch
        %417 = sbr.rel (%p415) target = $region40
      $region39: #{gcn_encoder.5} parent=35 // pred_region
        %s418 = smul.u32 16, %s15
      $region40: #{gcn_encoder.5} parent=35 // pred_fallthru
        _
    $region36: #{gcn_encoder.5} parent=5 // pred_fallthru
      _
    %p419 = scmp.le.s32.totalorder 2, %s10
    // Predicated region
    $region41: #{gcn_encoder.5} parent=5 // pred_check
      %p420 = pneg %p419
    $region42: #{gcn_encoder.5} parent=5 // pred_check_branch
      %422 = sbr.rel (%p420) target = $region44
    $region43: #{gcn_encoder.5} parent=5 // pred_region
      %s423 = ssub.s32 %s10, 2
      // Predicated region
      $region45: #{gcn_encoder.5} parent=43 // pred_check
        %p424 = pneg %p128
      $region46: #{gcn_encoder.5} parent=43 // pred_check_branch
        %426 = sbr.rel (%p424) target = $region48
      $region47: #{gcn_encoder.5} parent=43 // pred_region
        %s427 = smul.u32 16, %s16
        %p428 = scmp.lt.s32.totalorder %s427, 47
        %s429 = scalar_select %p428, %s427, 47
        %s430 = smul.addr %s429, 4
        %s431 = scalar_lea.vmem %s4, %s430
      $region48: #{gcn_encoder.5} parent=43 // pred_fallthru
        _
    $region44: #{gcn_encoder.5} parent=5 // pred_fallthru
      _
  $region6: #{gcn_encoder.5} parent=0 // loop_footer
    %s14 = sadd.s32 1, %s10
  $region7: #{gcn_encoder.5} parent=0 // loop_footer_branch
    %9 = sbr.rel target = $region3
  $region8: #{gcn_encoder.5} parent=0 // loop_exit
    _

// kernel: gcn_encoder.6
$region0: #{gcn_encoder.6}
  #allocation0 [shape = 'u32[]', space=smem, size = 0x4, offset = 0x4, fixed_abs, tag = 'smem constant byte address 0x4 - core index']
  #allocation1 [shape = 'u32[72,128]{1,0:T(1,128)}', space=vmem, size = 0x9000, scoped, tag = 'internal scratch']
  %s0 = inlined_call_operand.vmem [shape: bf16[384,384], index: 0, kind: input, shape index: {}]
  %s1 = inlined_call_operand.vmem [shape: bf16[384,128], index: 1, kind: input, shape index: {}]
  %s2 = inlined_call_operand.vmem [shape: f32[1,128], index: 2, kind: input, shape index: {}]
  %s3 = inlined_call_operand.vmem [shape: f32[384,1], index: 3, kind: input, shape index: {}]
  %s4 = inlined_call_operand.vmem [shape: f32[384,128], index: 4, kind: output, shape index: {0}]
  %s5 = inlined_call_operand.vmem [shape: f32[3,8,128], index: 5, kind: output, shape index: {1}]
  %s6 = inlined_call_operand.vmem [shape: f32[3,8,128], index: 6, kind: output, shape index: {2}]
  %7 = xla_tuple %s4, %s5, %s6
  %s8 = sld [smem:[#allocation0]]
  $region114: #{gcn_encoder.6} parent=0
    _
  %s10 = ssub.s32 1, %s8
  %s11 = scalar_select 0, %s10, %s8
  $region1: #{gcn_encoder.6} parent=0
    #allocation2 [shape = 'u8[65536]{0}', space=vmem, size = 0x10000, scoped, tag = 'input window, operand 0']
    loop: start=0, step=1, limit=11
    $region2: #{gcn_encoder.6} parent=1 // loop_pre_header
      _
    $region3: #{gcn_encoder.6} parent=1 // loop_header
      %s13 = sphi 0, %s17
      %p14 = scmp.ge.s32.totalorder %s13, 11
      %s20 = sphi 0, %s32
      %s21 = sphi 0, %s28
      %s22 = sphi 0, %s20
      %s23 = sphi 0, %s21
      %s24 = sphi 0, %s22
      %s25 = sphi 0, %s23
      %s37 = sphi 0, %s39
      %s40 = sphi 0, %s37
      %s41 = sphi 0, %s40
      %s57 = sphi 0, %s41
      %s63 = sphi 0, %s65
      %s66 = sphi 0, %s63
      %s67 = sphi 0, %s66
      %s83 = sphi 0, %s67
      %s87 = sphi 0, %s87
      %s89 = sphi 0, %s87
      %s90 = sphi 0, %s89
      %s104 = sphi 0, %s90
      %s110 = sphi 0, %s112
      %s113 = sphi 0, %s110
      %s114 = sphi 0, %s113
      %s130 = sphi 0, %s114
      %s136 = sphi 0, %s138
      %s139 = sphi 0, %s136
      %s140 = sphi 0, %s139
      %s156 = sphi 0, %s140
      %s162 = sphi 0, %s164
      %s165 = sphi 0, %s162
      %s166 = sphi 0, %s165
      %s182 = sphi 0, %s166
      %s188 = sphi 0, %s190
      %s191 = sphi 0, %s188
      %s192 = sphi 0, %s191
      %s208 = sphi 0, %s192
    $region4: #{gcn_encoder.6} parent=1 // loop_header_branch
      %16 = sbr.rel (%p14) target = $region8
    $region5: #{gcn_encoder.6} parent=1 // loop_body
      %s18 = ssub.s32 %s13, 1
      %s19 = ssub.s32 %s13, 2
      %s26 = sadd.s32 1, %s21
      %p27 = scmp.ge.s32.totalorder %s26, 3
      %s28 = scalar_select %p27, 0, %s26
      %s29 = sadd.s32 1, %s20
      %s30 = scalar_select %p27, %s29, %s20
      %p31 = scmp.ge.s32.totalorder %s30, 3
      %s32 = scalar_select %p31, 0, %s30
      %s33 = ssub.s32 %s20, %s32
      %s34 = ssub.s32 %s21, %s28
      %s35 = sor.u32 %s33, %s34
      %p36 = scmp.eq.s32.totalorder %s35, 0
      %s38 = sadd.s32 %s37, 1
      %s39 = scalar_select %p36, %s37, %s38
      %p42 = pneg %p36
      %p43 = scmp.eq.s32.totalorder %s13, 8
      %p44 = por %p42, %p43
      %p45 = scmp.ne.s32.totalorder %s37, %s40
      %p46 = scmp.eq.s32.totalorder %s13, 0
      %p47 = por %p45, %p46
      %p48 = scmp.ne.s32.totalorder %s37, %s40
      %p49 = scmp.eq.s32.totalorder %s18, 8
      %p50 = por %p48, %p49
      %p51 = scmp.ne.s32.totalorder %s40, %s41
      %p52 = scmp.eq.s32.totalorder %s18, 0
      %p53 = por %p51, %p52
      %p54 = scmp.ne.s32.totalorder %s40, %s41
      %p55 = scmp.eq.s32.totalorder %s19, 8
      %p56 = por %p54, %p55
      %p58 = scmp.ne.s32.totalorder %s41, %s57
      %p59 = scmp.eq.s32.totalorder %s19, 0
      %p60 = por %p58, %p59
      %s61 = ssub.s32 %s21, %s28
      %p62 = scmp.eq.s32.totalorder %s61, 0
      %s64 = sadd.s32 %s63, 1
      %s65 = scalar_select %p62, %s63, %s64
      %p68 = pneg %p62
      %p69 = scmp.eq.s32.totalorder %s13, 8
      %p70 = por %p68, %p69
      %p71 = scmp.ne.s32.totalorder %s63, %s66
      %p72 = scmp.eq.s32.totalorder %s13, 0
      %p73 = por %p71, %p72
      %p74 = scmp.ne.s32.totalorder %s63, %s66
      %p75 = scmp.eq.s32.totalorder %s18, 8
      %p76 = por %p74, %p75
      %p77 = scmp.ne.s32.totalorder %s66, %s67
      %p78 = scmp.eq.s32.totalorder %s18, 0
      %p79 = por %p77, %p78
      %p80 = scmp.ne.s32.totalorder %s66, %s67
      %p81 = scmp.eq.s32.totalorder %s19, 8
      %p82 = por %p80, %p81
      %p84 = scmp.ne.s32.totalorder %s67, %s83
      %p85 = scmp.eq.s32.totalorder %s19, 0
      %p86 = por %p84, %p85
      %s88 = sadd.s32 %s87, 1
      %p91 = scmp.eq.s32.totalorder %s13, 8
      %p92 = scmp.ne.s32.totalorder %s87, %s89
      %p93 = scmp.eq.s32.totalorder %s13, 0
      %p94 = por %p92, %p93
      %p95 = scmp.ne.s32.totalorder %s87, %s89
      %p96 = scmp.eq.s32.totalorder %s18, 8
      %p97 = por %p95, %p96
      %p98 = scmp.ne.s32.totalorder %s89, %s90
      %p99 = scmp.eq.s32.totalorder %s18, 0
      %p100 = por %p98, %p99
      %p101 = scmp.ne.s32.totalorder %s89, %s90
      %p102 = scmp.eq.s32.totalorder %s19, 8
      %p103 = por %p101, %p102
      %p105 = scmp.ne.s32.totalorder %s90, %s104
      %p106 = scmp.eq.s32.totalorder %s19, 0
      %p107 = por %p105, %p106
      %s108 = ssub.s32 %s20, %s32
      %p109 = scmp.eq.s32.totalorder %s108, 0
      %s111 = sadd.s32 %s110, 1
      %s112 = scalar_select %p109, %s110, %s111
      %p115 = pneg %p109
      %p116 = scmp.eq.s32.totalorder %s13, 8
      %p117 = por %p115, %p116
      %p118 = scmp.ne.s32.totalorder %s110, %s113
      %p119 = scmp.eq.s32.totalorder %s13, 0
      %p120 = por %p118, %p119
      %p121 = scmp.ne.s32.totalorder %s110, %s113
      %p122 = scmp.eq.s32.totalorder %s18, 8
      %p123 = por %p121, %p122
      %p124 = scmp.ne.s32.totalorder %s113, %s114
      %p125 = scmp.eq.s32.totalorder %s18, 0
      %p126 = por %p124, %p125
      %p127 = scmp.ne.s32.totalorder %s113, %s114
      %p128 = scmp.eq.s32.totalorder %s19, 8
      %p129 = por %p127, %p128
      %p131 = scmp.ne.s32.totalorder %s114, %s130
      %p132 = scmp.eq.s32.totalorder %s19, 0
      %p133 = por %p131, %p132
      %s134 = ssub.s32 %s20, %s32
      %p135 = scmp.eq.s32.totalorder %s134, 0
      %s137 = sadd.s32 %s136, 1
      %s138 = scalar_select %p135, %s136, %s137
      %p141 = pneg %p135
      %p142 = scmp.eq.s32.totalorder %s13, 8
      %p143 = por %p141, %p142
      %p144 = scmp.ne.s32.totalorder %s136, %s139
      %p145 = scmp.eq.s32.totalorder %s13, 0
      %p146 = por %p144, %p145
      %p147 = scmp.ne.s32.totalorder %s136, %s139
      %p148 = scmp.eq.s32.totalorder %s18, 8
      %p149 = por %p147, %p148
      %p150 = scmp.ne.s32.totalorder %s139, %s140
      %p151 = scmp.eq.s32.totalorder %s18, 0
      %p152 = por %p150, %p151
      %p153 = scmp.ne.s32.totalorder %s139, %s140
      %p154 = scmp.eq.s32.totalorder %s19, 8
      %p155 = por %p153, %p154
      %p157 = scmp.ne.s32.totalorder %s140, %s156
      %p158 = scmp.eq.s32.totalorder %s19, 0
      %p159 = por %p157, %p158
      %s160 = ssub.s32 %s20, %s32
      %p161 = scmp.eq.s32.totalorder %s160, 0
      %s163 = sadd.s32 %s162, 1
      %s164 = scalar_select %p161, %s162, %s163
      %p167 = pneg %p161
      %p168 = scmp.eq.s32.totalorder %s13, 8
      %p169 = por %p167, %p168
      %p170 = scmp.ne.s32.totalorder %s162, %s165
      %p171 = scmp.eq.s32.totalorder %s13, 0
      %p172 = por %p170, %p171
      %p173 = scmp.ne.s32.totalorder %s162, %s165
      %p174 = scmp.eq.s32.totalorder %s18, 8
      %p175 = por %p173, %p174
      %p176 = scmp.ne.s32.totalorder %s165, %s166
      %p177 = scmp.eq.s32.totalorder %s18, 0
      %p178 = por %p176, %p177
      %p179 = scmp.ne.s32.totalorder %s165, %s166
      %p180 = scmp.eq.s32.totalorder %s19, 8
      %p181 = por %p179, %p180
      %p183 = scmp.ne.s32.totalorder %s166, %s182
      %p184 = scmp.eq.s32.totalorder %s19, 0
      %p185 = por %p183, %p184
      %s186 = ssub.s32 %s20, %s32
      %p187 = scmp.eq.s32.totalorder %s186, 0
      %s189 = sadd.s32 %s188, 1
      %s190 = scalar_select %p187, %s188, %s189
      %p193 = pneg %p187
      %p194 = scmp.eq.s32.totalorder %s13, 8
      %p195 = por %p193, %p194
      %p196 = scmp.ne.s32.totalorder %s188, %s191
      %p197 = scmp.eq.s32.totalorder %s13, 0
      %p198 = por %p196, %p197
      %p199 = scmp.ne.s32.totalorder %s188, %s191
      %p200 = scmp.eq.s32.totalorder %s18, 8
      %p201 = por %p199, %p200
      %p202 = scmp.ne.s32.totalorder %s191, %s192
      %p203 = scmp.eq.s32.totalorder %s18, 0
      %p204 = por %p202, %p203
      %p205 = scmp.ne.s32.totalorder %s191, %s192
      %p206 = scmp.eq.s32.totalorder %s19, 8
      %p207 = por %p205, %p206
      %p209 = scmp.ne.s32.totalorder %s192, %s208
      %p210 = scmp.eq.s32.totalorder %s19, 0
      %p211 = por %p209, %p210
      %p212 = scmp.le.s32.totalorder 1, %s13
      %p213 = scmp.lt.s32.totalorder %s13, 10
      %p214 = pnand %p212, %p213
      %p215 = pneg %p214
      // Predicated region
      $region9: #{gcn_encoder.6} parent=5 // pred_check
        _
      $region10: #{gcn_encoder.6} parent=5 // pred_check_branch
        %217 = sbr.rel (%p214) target = $region12
      $region11: #{gcn_encoder.6} parent=5 // pred_region
        %s218 = ssub.s32 %s13, 1
        // Predicated region
        $region13: #{gcn_encoder.6} parent=11 // pred_check
          %p219 = pneg %p100
        $region14: #{gcn_encoder.6} parent=11 // pred_check_branch
          %221 = sbr.rel (%p219) target = $region16
        $region15: #{gcn_encoder.6} parent=11 // pred_region
          _
        $region16: #{gcn_encoder.6} parent=11 // pred_fallthru
          _
      $region12: #{gcn_encoder.6} parent=5 // pred_fallthru
        _
      %p222 = scmp.lt.s32.totalorder %s13, 9
      // Predicated region
      $region17: #{gcn_encoder.6} parent=5 // pred_check
        %p223 = pneg %p222
      $region18: #{gcn_encoder.6} parent=5 // pred_check_branch
        %225 = sbr.rel (%p223) target = $region20
      $region19: #{gcn_encoder.6} parent=5 // pred_region
        // Predicated region
        $region21: #{gcn_encoder.6} parent=19 // pred_check
          %p226 = pneg %p47
        $region22: #{gcn_encoder.6} parent=19 // pred_check_branch
          %228 = sbr.rel (%p226) target = $region24
        $region23: #{gcn_encoder.6} parent=19 // pred_region
          %s229 = sand.u32 %s37, 1
          %s230 = sand.u32 %s37, 1
          %s231 = smul.addr %s230, 64
          %s232 = scalar_lea.vmem [#allocation2], %s231
          %s233 = smul.u32 16, %s20
          %s234 = smul.addr %s233, 3
          %s235 = sadd.s32 %s21, %s234
          %s236 = smul.addr %s235, 4
          %s237 = scalar_lea.vmem %s0, %s236
          // Predicated region
          $region25: #{gcn_encoder.6} parent=23 // pred_check
            _
          $region26: #{gcn_encoder.6} parent=23 // pred_check_branch
            %239 = sbr.rel (0) target = $region28
          $region27: #{gcn_encoder.6} parent=23 // pred_region
            // Predicated region
            $region29: #{gcn_encoder.6} parent=27 // pred_check
              _
            $region30: #{gcn_encoder.6} parent=27 // pred_check_branch
              %241 = sbr.rel target = $region32
            $region31: #{gcn_encoder.6} parent=27 // pred_region
              // Predicated region
              $region44: #{gcn_encoder.6} parent=31 // pred_check
                _
              $region45: #{gcn_encoder.6} parent=31 // pred_check_branch
                %287 = sbr.rel (0) target = $region47
              $region46: #{gcn_encoder.6} parent=31 // pred_region
                loop: start=0, step=1, limit=1
                $region48: #{gcn_encoder.6} parent=46 // loop_pre_header
                  _
                $region49: #{gcn_encoder.6} parent=46 // loop_header
                  %s289 = sphi 0, %s293
                  %p290 = scmp.ge.s32.totalorder %s289, 1
                  %s294 = sphi %s237, %s237
                  %s295 = sphi %s232, %s232
                $region50: #{gcn_encoder.6} parent=46 // loop_header_branch
                  %292 = sbr.rel (%p290) target = $region54
                $region51: #{gcn_encoder.6} parent=46 // loop_body
                  _
                $region52: #{gcn_encoder.6} parent=46 // loop_footer
                  %s293 = sadd.s32 1, %s289
                $region53: #{gcn_encoder.6} parent=46 // loop_footer_branch
                  %288 = sbr.rel target = $region49
                $region54: #{gcn_encoder.6} parent=46 // loop_exit
                  _
                %s297 = ssub.s32 16, 1
                loop: start=0, step=1, limit=1
                $region55: #{gcn_encoder.6} parent=46 // loop_pre_header
                  _
                $region56: #{gcn_encoder.6} parent=46 // loop_header
                  %s299 = sphi 0, %s303
                  %p300 = scmp.ge.s32.totalorder %s299, 1
                  %s304 = sphi %s237, %s237
                  %s305 = sphi %s232, %s232
                $region57: #{gcn_encoder.6} parent=46 // loop_header_branch
                  %302 = sbr.rel (%p300) target = $region61
                $region58: #{gcn_encoder.6} parent=46 // loop_body
                  %v306 = vld [vmem:[%s304] sm:%s297]
                  %307 = vst [vmem:[%s305] sm:%s297] %v306
                  %v308 = vld [vmem:[%s304 + $0xc] sm:%s297]
                  %309 = vst [vmem:[%s305 + $0x4] sm:%s297] %v308
                  %v310 = vld [vmem:[%s304 + $0x18] sm:%s297]
                  %311 = vst [vmem:[%s305 + $0x8] sm:%s297] %v310
                  %v312 = vld [vmem:[%s304 + $0x24] sm:%s297]
                  %313 = vst [vmem:[%s305 + $0xc] sm:%s297] %v312
                  %v314 = vld [vmem:[%s304 + $0x30] sm:%s297]
                  %315 = vst [vmem:[%s305 + $0x10] sm:%s297] %v314
                  %v316 = vld [vmem:[%s304 + $0x3c] sm:%s297]
                  %317 = vst [vmem:[%s305 + $0x14] sm:%s297] %v316
                  %v318 = vld [vmem:[%s304 + $0x48] sm:%s297]
                  %319 = vst [vmem:[%s305 + $0x18] sm:%s297] %v318
                  %v320 = vld [vmem:[%s304 + $0x54] sm:%s297]
                  %321 = vst [vmem:[%s305 + $0x1c] sm:%s297] %v320
                  %v322 = vld [vmem:[%s304 + $0x60] sm:%s297]
                  %323 = vst [vmem:[%s305 + $0x20] sm:%s297] %v322
                  %v324 = vld [vmem:[%s304 + $0x6c] sm:%s297]
                  %325 = vst [vmem:[%s305 + $0x24] sm:%s297] %v324
                  %v326 = vld [vmem:[%s304 + $0x78] sm:%s297]
                  %327 = vst [vmem:[%s305 + $0x28] sm:%s297] %v326
                  %v328 = vld [vmem:[%s304 + $0x84] sm:%s297]
                  %329 = vst [vmem:[%s305 + $0x2c] sm:%s297] %v328
                  %v330 = vld [vmem:[%s304 + $0x90] sm:%s297]
                  %331 = vst [vmem:[%s305 + $0x30] sm:%s297] %v330
                  %v332 = vld [vmem:[%s304 + $0x9c] sm:%s297]
                  %333 = vst [vmem:[%s305 + $0x34] sm:%s297] %v332
                  %v334 = vld [vmem:[%s304 + $0xa8] sm:%s297]
                  %335 = vst [vmem:[%s305 + $0x38] sm:%s297] %v334
                  %v336 = vld [vmem:[%s304 + $0xb4] sm:%s297]
                  %337 = vst [vmem:[%s305 + $0x3c] sm:%s297] %v336
                $region59: #{gcn_encoder.6} parent=46 // loop_footer
                  %s303 = sadd.s32 1, %s299
                $region60: #{gcn_encoder.6} parent=46 // loop_footer_branch
                  %298 = sbr.rel target = $region56
                $region61: #{gcn_encoder.6} parent=46 // loop_exit
                  _
              $region47: #{gcn_encoder.6} parent=31 // pred_fallthru
                _
            $region32: #{gcn_encoder.6} parent=27 // pred_fallthru
              _
            // Predicated region
            $region33: #{gcn_encoder.6} parent=27 // pred_check
              _
            $region34: #{gcn_encoder.6} parent=27 // pred_check_branch
              %243 = sbr.rel (0) target = $region36
            $region35: #{gcn_encoder.6} parent=27 // pred_region
              %s245 = ssub.s32 16, 1
              loop: start=0, step=1, limit=1
              $region37: #{gcn_encoder.6} parent=35 // loop_pre_header
                _
              $region38: #{gcn_encoder.6} parent=35 // loop_header
                %s247 = sphi 0, %s251
                %p248 = scmp.ge.s32.totalorder %s247, 1
                %s252 = sphi %s237, %s237
                %s253 = sphi %s232, %s232
              $region39: #{gcn_encoder.6} parent=35 // loop_header_branch
                %250 = sbr.rel (%p248) target = $region43
              $region40: #{gcn_encoder.6} parent=35 // loop_body
                %v254 = vld [vmem:[%s252] sm:%s245]
                %255 = vst [vmem:[%s253] sm:%s245] %v254
                %v256 = vld [vmem:[%s252 + $0xc] sm:%s245]
                %257 = vst [vmem:[%s253 + $0x4] sm:%s245] %v256
                %v258 = vld [vmem:[%s252 + $0x18] sm:%s245]
                %259 = vst [vmem:[%s253 + $0x8] sm:%s245] %v258
                %v260 = vld [vmem:[%s252 + $0x24] sm:%s245]
                %261 = vst [vmem:[%s253 + $0xc] sm:%s245] %v260
                %v262 = vld [vmem:[%s252 + $0x30] sm:%s245]
                %263 = vst [vmem:[%s253 + $0x10] sm:%s245] %v262
                %v264 = vld [vmem:[%s252 + $0x3c] sm:%s245]
                %265 = vst [vmem:[%s253 + $0x14] sm:%s245] %v264
                %v266 = vld [vmem:[%s252 + $0x48] sm:%s245]
                %267 = vst [vmem:[%s253 + $0x18] sm:%s245] %v266
                %v268 = vld [vmem:[%s252 + $0x54] sm:%s245]
                %269 = vst [vmem:[%s253 + $0x1c] sm:%s245] %v268
                %v270 = vld [vmem:[%s252 + $0x60] sm:%s245]
                %271 = vst [vmem:[%s253 + $0x20] sm:%s245] %v270
                %v272 = vld [vmem:[%s252 + $0x6c] sm:%s245]
                %273 = vst [vmem:[%s253 + $0x24] sm:%s245] %v272
                %v274 = vld [vmem:[%s252 + $0x78] sm:%s245]
                %275 = vst [vmem:[%s253 + $0x28] sm:%s245] %v274
                %v276 = vld [vmem:[%s252 + $0x84] sm:%s245]
                %277 = vst [vmem:[%s253 + $0x2c] sm:%s245] %v276
                %v278 = vld [vmem:[%s252 + $0x90] sm:%s245]
                %279 = vst [vmem:[%s253 + $0x30] sm:%s245] %v278
                %v280 = vld [vmem:[%s252 + $0x9c] sm:%s245]
                %281 = vst [vmem:[%s253 + $0x34] sm:%s245] %v280
                %v282 = vld [vmem:[%s252 + $0xa8] sm:%s245]
                %283 = vst [vmem:[%s253 + $0x38] sm:%s245] %v282
                %v284 = vld [vmem:[%s252 + $0xb4] sm:%s245]
                %285 = vst [vmem:[%s253 + $0x3c] sm:%s245] %v284
              $region41: #{gcn_encoder.6} parent=35 // loop_footer
                %s251 = sadd.s32 1, %s247
              $region42: #{gcn_encoder.6} parent=35 // loop_footer_branch
                %246 = sbr.rel target = $region38
              $region43: #{gcn_encoder.6} parent=35 // loop_exit
                _
            $region36: #{gcn_encoder.6} parent=27 // pred_fallthru
              _
          $region28: #{gcn_encoder.6} parent=23 // pred_fallthru
            _
          %338 = vnop
        $region24: #{gcn_encoder.6} parent=19 // pred_fallthru
          _
        // Predicated region
        $region62: #{gcn_encoder.6} parent=19 // pred_check
          %p339 = pneg %p73
        $region63: #{gcn_encoder.6} parent=19 // pred_check_branch
          %341 = sbr.rel (%p339) target = $region65
        $region64: #{gcn_encoder.6} parent=19 // pred_region
          %s342 = smul.u32 16, %s21
          %p343 = scmp.lt.s32.totalorder %s342, 47
          %s344 = scalar_select %p343, %s342, 47
          %s345 = smul.addr %s344, 4
          %s346 = scalar_lea.vmem %s1, %s345
          %s347 = smul.u32 16, %s21
        $region65: #{gcn_encoder.6} parent=19 // pred_fallthru
          _
        // Predicated region
        $region66: #{gcn_encoder.6} parent=19 // pred_check
          %p348 = pneg %p120
        $region67: #{gcn_encoder.6} parent=19 // pred_check_branch
          %350 = sbr.rel (%p348) target = $region69
        $region68: #{gcn_encoder.6} parent=19 // pred_region
          %s351 = smul.u32 16, %s20
          %p352 = scmp.lt.s32.totalorder %s351, 47
          %s353 = scalar_select %p352, %s351, 47
          %s354 = smul.addr %s353, 8
          %s355 = scalar_lea.vmem %s3, %s354
          %s356 = smul.u32 16, %s20
        $region69: #{gcn_encoder.6} parent=19 // pred_fallthru
          _
      $region20: #{gcn_encoder.6} parent=5 // pred_fallthru
        _
      %p357 = scmp.le.s32.totalorder 1, %s13
      %p358 = scmp.lt.s32.totalorder %s13, 10
      %p359 = pnand %p357, %p358
      %p360 = pneg %p359
      // Predicated region
      $region70: #{gcn_encoder.6} parent=5 // pred_check
        _
      $region71: #{gcn_encoder.6} parent=5 // pred_check_branch
        %362 = sbr.rel (%p359) target = $region73
      $region72: #{gcn_encoder.6} parent=5 // pred_region
        %s363 = ssub.s32 %s13, 1
        %s364 = sand.u32 %s40, 1
        %s365 = sand.u32 %s40, 1
        %s366 = smul.addr %s365, 64
        %s367 = scalar_lea.vmem [#allocation2], %s366
        // Predicated region
        $region74: #{gcn_encoder.6} parent=72 // pred_check
          %p368 = pneg %p53
        $region75: #{gcn_encoder.6} parent=72 // pred_check_branch
          %370 = sbr.rel (%p368) target = $region77
        $region76: #{gcn_encoder.6} parent=72 // pred_region
          _
        $region77: #{gcn_encoder.6} parent=72 // pred_fallthru
          _
        %s371 = sand.u32 %s40, 1
        %s372 = sand.u32 %s40, 1
        %s373 = smul.addr %s372, 64
        %s374 = scalar_lea.vmem [#allocation2], %s373
        %p375 = pneg %p53
        %p376 = pneg %p50
        %s377 = smul.u32 16, %s23
        %p378 = scmp.lt.s32.totalorder %s377, 47
        %s379 = scalar_select %p378, %s377, 47
        %s380 = smul.addr %s379, 4
        %s381 = scalar_lea.vmem %s1, %s380
        %p382 = pneg %p79
        %p383 = pneg %p76
        %p384 = pneg %p100
        %p385 = pneg %p97
        %s386 = smul.u32 16, %s22
        %p387 = scmp.lt.s32.totalorder %s386, 47
        %s388 = scalar_select %p387, %s386, 47
        %s389 = smul.addr %s388, 8
        %s390 = scalar_lea.vmem %s3, %s389
        %p391 = pneg %p126
        %p392 = pneg %p123
        %p393 = pneg %p152
        %p394 = pneg %p149
        %s395 = smul.u32 16, %s22
        %p396 = scmp.lt.s32.totalorder %s395, 47
        %s397 = scalar_select %p396, %s395, 47
        %s398 = smul.addr %s397, 8
        %s399 = scalar_lea.vmem %s4, %s398
        %p400 = pneg %p178
        %p401 = pneg %p175
        %p402 = scmp.lt.s32.totalorder %s22, 2
        %s403 = scalar_select %p402, %s22, 2
        %s404 = smul.addr %s403, 8
        %s405 = scalar_lea.vmem %s5, %s404
        %p406 = pneg %p204
        %p407 = pneg %p201
        %p408 = scmp.lt.s32.totalorder %s22, 2
        %s409 = scalar_select %p408, %s22, 2
        %s410 = smul.addr %s409, 8
        %s411 = scalar_lea.vmem %s6, %s410
        %s412 = smul.u32 16, %s22
        %s413 = smul.u32 16, %s23
        %p414 = scmp.lt.s32.totalorder %s413, 47
        %s415 = scalar_select %p414, %s413, 47
        %s416 = smul.addr %s415, 4
        %s417 = scalar_lea.vmem %s1, %s416
        %s418 = smul.u32 16, %s23
        %s419 = smul.u32 16, %s22
        %p420 = scmp.lt.s32.totalorder %s419, 47
        %s421 = scalar_select %p420, %s419, 47
        %s422 = smul.addr %s421, 8
        %s423 = scalar_lea.vmem %s3, %s422
        %s424 = smul.u32 16, %s22
        %s425 = smul.u32 16, %s22
        %p426 = scmp.lt.s32.totalorder %s425, 47
        %s427 = scalar_select %p426, %s425, 47
        %s428 = smul.addr %s427, 8
        %s429 = scalar_lea.vmem %s4, %s428
        %s430 = smul.u32 16, %s22
        %p431 = scmp.lt.s32.totalorder %s22, 2
        %s432 = scalar_select %p431, %s22, 2
        %s433 = smul.addr %s432, 8
        %s434 = scalar_lea.vmem %s5, %s433
        %p435 = scmp.lt.s32.totalorder %s22, 2
        %s436 = scalar_select %p435, %s22, 2
        %s437 = smul.addr %s436, 8
        %s438 = scalar_lea.vmem %s6, %s437
        %p439 = scmp.eq.s32.totalorder %s23, 0
        // Predicated region
        $region78: #{gcn_encoder.6} parent=72 // pred_check
          %p440 = pneg %p439
        $region79: #{gcn_encoder.6} parent=72 // pred_check_branch
          %442 = sbr.rel (%p440) target = $region81
        $region80: #{gcn_encoder.6} parent=72 // pred_region
          %443 = vst [vmem:[%s429] sm:$0xff] 0.0
          %444 = vst [vmem:[%s429 + $0x8] sm:$0xff] 0.0
          %445 = vst [vmem:[%s429 + $0x10] sm:$0xff] 0.0
          %446 = vst [vmem:[%s429 + $0x18] sm:$0xff] 0.0
          %447 = vst [vmem:[%s429 + $0x20] sm:$0xff] 0.0
          %448 = vst [vmem:[%s429 + $0x28] sm:$0xff] 0.0
          %449 = vst [vmem:[%s429 + $0x30] sm:$0xff] 0.0
          %450 = vst [vmem:[%s429 + $0x38] sm:$0xff] 0.0
          %451 = vst [vmem:[%s429 + $0x40] sm:$0xff] 0.0
          %452 = vst [vmem:[%s429 + $0x48] sm:$0xff] 0.0
          %453 = vst [vmem:[%s429 + $0x50] sm:$0xff] 0.0
          %454 = vst [vmem:[%s429 + $0x58] sm:$0xff] 0.0
          %455 = vst [vmem:[%s429 + $0x60] sm:$0xff] 0.0
          %456 = vst [vmem:[%s429 + $0x68] sm:$0xff] 0.0
          %457 = vst [vmem:[%s429 + $0x70] sm:$0xff] 0.0
          %458 = vst [vmem:[%s429 + $0x78] sm:$0xff] 0.0
        $region81: #{gcn_encoder.6} parent=72 // pred_fallthru
          _
        %v459 = vld [vmem:[%s429] sm:$0xff]
        %v460 = vld [vmem:[%s429 + $0x8] sm:$0xff]
        %v461 = vld [vmem:[%s429 + $0x10] sm:$0xff]
        %v462 = vld [vmem:[%s429 + $0x18] sm:$0xff]
        %v463 = vld [vmem:[%s429 + $0x20] sm:$0xff]
        %v464 = vld [vmem:[%s429 + $0x28] sm:$0xff]
        %v465 = vld [vmem:[%s429 + $0x30] sm:$0xff]
        %v466 = vld [vmem:[%s429 + $0x38] sm:$0xff]
        %v467 = vld [vmem:[%s429 + $0x40] sm:$0xff]
        %v468 = vld [vmem:[%s429 + $0x48] sm:$0xff]
        %v469 = vld [vmem:[%s429 + $0x50] sm:$0xff]
        %v470 = vld [vmem:[%s429 + $0x58] sm:$0xff]
        %v471 = vld [vmem:[%s429 + $0x60] sm:$0xff]
        %v472 = vld [vmem:[%s429 + $0x68] sm:$0xff]
        %v473 = vld [vmem:[%s429 + $0x70] sm:$0xff]
        %v474 = vld [vmem:[%s429 + $0x78] sm:$0xff]
        %v475 = vld [vmem:[%s367] sm:$0xf]
        %v476 = vld [vmem:[%s367 + $0x4] sm:$0xf]
        %v477 = vld [vmem:[%s367 + $0x8] sm:$0xf]
        %v478 = vld [vmem:[%s367 + $0xc] sm:$0xf]
        %v479 = vld [vmem:[%s367 + $0x10] sm:$0xf]
        %v480 = vld [vmem:[%s367 + $0x14] sm:$0xf]
        %v481 = vld [vmem:[%s367 + $0x18] sm:$0xf]
        %v482 = vld [vmem:[%s367 + $0x1c] sm:$0xf]
        %v483 = vld [vmem:[%s367 + $0x20] sm:$0xf]
        %v484 = vld [vmem:[%s367 + $0x24] sm:$0xf]
        %v485 = vld [vmem:[%s367 + $0x28] sm:$0xf]
        %v486 = vld [vmem:[%s367 + $0x2c] sm:$0xf]
        %v487 = vld [vmem:[%s367 + $0x30] sm:$0xf]
        %v488 = vld [vmem:[%s367 + $0x34] sm:$0xf]
        %v489 = vld [vmem:[%s367 + $0x38] sm:$0xf]
        %v490 = vld [vmem:[%s367 + $0x3c] sm:$0xf]
        %v491 = vld [vmem:[%s417] sm:$0xf]
        %v492 = vld [vmem:[%s417 + $0x4] sm:$0xf]
        %v493 = vld [vmem:[%s417 + $0x8] sm:$0xf]
        %v494 = vld [vmem:[%s417 + $0xc] sm:$0xf]
        %v495 = vld [vmem:[%s417 + $0x10] sm:$0xf]
        %v496 = vld [vmem:[%s417 + $0x14] sm:$0xf]
        %v497 = vld [vmem:[%s417 + $0x18] sm:$0xf]
        %v498 = vld [vmem:[%s417 + $0x1c] sm:$0xf]
        %v499 = vld [vmem:[%s417 + $0x20] sm:$0xf]
        %v500 = vld [vmem:[%s417 + $0x24] sm:$0xf]
        %v501 = vld [vmem:[%s417 + $0x28] sm:$0xf]
        %v502 = vld [vmem:[%s417 + $0x2c] sm:$0xf]
        %v503 = vld [vmem:[%s417 + $0x30] sm:$0xf]
        %v504 = vld [vmem:[%s417 + $0x34] sm:$0xf]
        %v505 = vld [vmem:[%s417 + $0x38] sm:$0xf]
        %v506 = vld [vmem:[%s417 + $0x3c] sm:$0xf]
        %v523 = vunpack.c.l.b16 %v475
        %v524 = vunpack.c.l.b16 %v476
        %v525 = vunpack.c.l.b16 %v477
        %v526 = vunpack.c.l.b16 %v478
        %v527 = vunpack.c.l.b16 %v479
        %v528 = vunpack.c.l.b16 %v480
        %v529 = vunpack.c.l.b16 %v481
        %v530 = vunpack.c.l.b16 %v482
        %v531 = vunpack.c.l.b16 %v483
        %v532 = vunpack.c.l.b16 %v484
        %v533 = vunpack.c.l.b16 %v485
        %v534 = vunpack.c.l.b16 %v486
        %v535 = vunpack.c.l.b16 %v487
        %v536 = vunpack.c.l.b16 %v488
        %v537 = vunpack.c.l.b16 %v489
        %v538 = vunpack.c.l.b16 %v490
        %v539 = vpack.c.b16 %v524, %v523
        %v540 = vpack.c.b16 %v526, %v525
        %v541 = vpack.c.b16 %v528, %v527
        %v542 = vpack.c.b16 %v530, %v529
        %v543 = vpack.c.b16 %v532, %v531
        %v544 = vpack.c.b16 %v534, %v533
        %v545 = vpack.c.b16 %v536, %v535
        %v546 = vpack.c.b16 %v538, %v537
        %v571 = vunpack.c.l.b16 %v491
        %v572 = vunpack.c.l.b16 %v492
        %v573 = vunpack.c.l.b16 %v493
        %v574 = vunpack.c.l.b16 %v494
        %v575 = vunpack.c.l.b16 %v495
        %v576 = vunpack.c.l.b16 %v496
        %v577 = vunpack.c.l.b16 %v497
        %v578 = vunpack.c.l.b16 %v498
        %v579 = vunpack.c.l.b16 %v499
        %v580 = vunpack.c.l.b16 %v500
        %v581 = vunpack.c.l.b16 %v501
        %v582 = vunpack.c.l.b16 %v502
        %v583 = vunpack.c.l.b16 %v503
        %v584 = vunpack.c.l.b16 %v504
        %v585 = vunpack.c.l.b16 %v505
        %v586 = vunpack.c.l.b16 %v506
        %v587 = vpack.c.b16 %v572, %v571
        %v588 = vpack.c.b16 %v574, %v573
        %v589 = vpack.c.b16 %v576, %v575
        %v590 = vpack.c.b16 %v578, %v577
        %v591 = vpack.c.b16 %v580, %v579
        %v592 = vpack.c.b16 %v582, %v581
        %v593 = vpack.c.b16 %v584, %v583
        %v594 = vpack.c.b16 %v586, %v585
        %603 = vmatpush.bf16.msra.mxu0 %v594
        %604 = vmatpush.bf16.msra.mxu0 %v593
        %605 = vmatpush.bf16.msra.mxu0 %v592
        %606 = vmatpush.bf16.msra.mxu0 %v591
        %607 = vmatpush.bf16.msra.mxu0 %v590
        %608 = vmatpush.bf16.msra.mxu0 %v589
        %609 = vmatpush.bf16.msra.mxu0 %v588
        %610 = vmatpush.bf16.msra.mxu0 %v587
        %611 = vmatmul.bf16.gmra.mxu0 %v539
        %v612 = vpop.f32.mrf.mxu0
        %v613 = vadd.f32 0.0, %v612
        %v614 = vpop.f32.mrf.mxu0
        %v615 = vadd.f32 0.0, %v614
        %616 = vmatmul.bf16.gmra.mxu0 %v540
        %v617 = vpop.f32.mrf.mxu0
        %v618 = vadd.f32 0.0, %v617
        %v619 = vpop.f32.mrf.mxu0
        %v620 = vadd.f32 0.0, %v619
        %621 = vmatmul.bf16.gmra.mxu0 %v541
        %v622 = vpop.f32.mrf.mxu0
        %v623 = vadd.f32 0.0, %v622
        %v624 = vpop.f32.mrf.mxu0
        %v625 = vadd.f32 0.0, %v624
        %626 = vmatmul.bf16.gmra.mxu0 %v542
        %v627 = vpop.f32.mrf.mxu0
        %v628 = vadd.f32 0.0, %v627
        %v629 = vpop.f32.mrf.mxu0
        %v630 = vadd.f32 0.0, %v629
        %631 = vmatmul.bf16.gmra.mxu0 %v543
        %v632 = vpop.f32.mrf.mxu0
        %v633 = vadd.f32 0.0, %v632
        %v634 = vpop.f32.mrf.mxu0
        %v635 = vadd.f32 0.0, %v634
        %636 = vmatmul.bf16.gmra.mxu0 %v544
        %v637 = vpop.f32.mrf.mxu0
        %v638 = vadd.f32 0.0, %v637
        %v639 = vpop.f32.mrf.mxu0
        %v640 = vadd.f32 0.0, %v639
        %641 = vmatmul.bf16.gmra.mxu0 %v545
        %v642 = vpop.f32.mrf.mxu0
        %v643 = vadd.f32 0.0, %v642
        %v644 = vpop.f32.mrf.mxu0
        %v645 = vadd.f32 0.0, %v644
        %646 = vmatmul.bf16.gmra.mxu0 %v546
        %v647 = vpop.f32.mrf.mxu0
        %v648 = vadd.f32 0.0, %v647
        %v649 = vpop.f32.mrf.mxu0
        %v650 = vadd.f32 0.0, %v649
        %651 = vdwg.mxu0
        %v652 = vadd.f32 %v459, %v613
        %v653 = vadd.f32 %v460, %v615
        %v654 = vadd.f32 %v461, %v618
        %v655 = vadd.f32 %v462, %v620
        %v656 = vadd.f32 %v463, %v623
        %v657 = vadd.f32 %v464, %v625
        %v658 = vadd.f32 %v465, %v628
        %v659 = vadd.f32 %v466, %v630
        %v660 = vadd.f32 %v467, %v633
        %v661 = vadd.f32 %v468, %v635
        %v662 = vadd.f32 %v469, %v638
        %v663 = vadd.f32 %v470, %v640
        %v664 = vadd.f32 %v471, %v643
        %v665 = vadd.f32 %v472, %v645
        %v666 = vadd.f32 %v473, %v648
        %v667 = vadd.f32 %v474, %v650
        %668 = vst [vmem:[%s429] sm:$0xff] %v652
        %669 = vst [vmem:[%s429 + $0x8] sm:$0xff] %v653
        %670 = vst [vmem:[%s429 + $0x10] sm:$0xff] %v654
        %671 = vst [vmem:[%s429 + $0x18] sm:$0xff] %v655
        %672 = vst [vmem:[%s429 + $0x20] sm:$0xff] %v656
        %673 = vst [vmem:[%s429 + $0x28] sm:$0xff] %v657
        %674 = vst [vmem:[%s429 + $0x30] sm:$0xff] %v658
        %675 = vst [vmem:[%s429 + $0x38] sm:$0xff] %v659
        %676 = vst [vmem:[%s429 + $0x40] sm:$0xff] %v660
        %677 = vst [vmem:[%s429 + $0x48] sm:$0xff] %v661
        %678 = vst [vmem:[%s429 + $0x50] sm:$0xff] %v662
        %679 = vst [vmem:[%s429 + $0x58] sm:$0xff] %v663
        %680 = vst [vmem:[%s429 + $0x60] sm:$0xff] %v664
        %681 = vst [vmem:[%s429 + $0x68] sm:$0xff] %v665
        %682 = vst [vmem:[%s429 + $0x70] sm:$0xff] %v666
        %683 = vst [vmem:[%s429 + $0x78] sm:$0xff] %v667
        %p684 = scmp.eq.s32.totalorder %s23, 2
        // Predicated region
        $region82: #{gcn_encoder.6} parent=72 // pred_check
          %p685 = pneg %p684
        $region83: #{gcn_encoder.6} parent=72 // pred_check_branch
          %687 = sbr.rel (%p685) target = $region85
        $region84: #{gcn_encoder.6} parent=72 // pred_region
          %v688 = vld [vmem:[%s429] sm:$0xff]
          %v689 = vld [vmem:[%s429 + $0x8] sm:$0xff]
          %v690 = vld [vmem:[%s429 + $0x10] sm:$0xff]
          %v691 = vld [vmem:[%s429 + $0x18] sm:$0xff]
          %v692 = vld [vmem:[%s429 + $0x20] sm:$0xff]
          %v693 = vld [vmem:[%s429 + $0x28] sm:$0xff]
          %v694 = vld [vmem:[%s429 + $0x30] sm:$0xff]
          %v695 = vld [vmem:[%s429 + $0x38] sm:$0xff]
          %v696 = vld [vmem:[%s429 + $0x40] sm:$0xff]
          %v697 = vld [vmem:[%s429 + $0x48] sm:$0xff]
          %v698 = vld [vmem:[%s429 + $0x50] sm:$0xff]
          %v699 = vld [vmem:[%s429 + $0x58] sm:$0xff]
          %v700 = vld [vmem:[%s429 + $0x60] sm:$0xff]
          %v701 = vld [vmem:[%s429 + $0x68] sm:$0xff]
          %v702 = vld [vmem:[%s429 + $0x70] sm:$0xff]
          %v703 = vld [vmem:[%s429 + $0x78] sm:$0xff]
          %v704 = vld [vmem:[%s2] sm:$0x1]
          %v706 = vperm.slane %v704, 0
          %v708 = vadd.f32 %v688, %v706
          %v709 = vadd.f32 %v689, %v706
          %v710 = vadd.f32 %v690, %v706
          %v711 = vadd.f32 %v691, %v706
          %v712 = vadd.f32 %v692, %v706
          %v713 = vadd.f32 %v693, %v706
          %v714 = vadd.f32 %v694, %v706
          %v715 = vadd.f32 %v695, %v706
          %v716 = vadd.f32 %v696, %v706
          %v717 = vadd.f32 %v697, %v706
          %v718 = vadd.f32 %v698, %v706
          %v719 = vadd.f32 %v699, %v706
          %v720 = vadd.f32 %v700, %v706
          %v721 = vadd.f32 %v701, %v706
          %v722 = vadd.f32 %v702, %v706
          %v723 = vadd.f32 %v703, %v706
          %724 = vst [vmem:[%s429] sm:$0xff] %v708
          %725 = vst [vmem:[%s429 + $0x8] sm:$0xff] %v709
          %726 = vst [vmem:[%s429 + $0x10] sm:$0xff] %v710
          %727 = vst [vmem:[%s429 + $0x18] sm:$0xff] %v711
          %728 = vst [vmem:[%s429 + $0x20] sm:$0xff] %v712
          %729 = vst [vmem:[%s429 + $0x28] sm:$0xff] %v713
          %730 = vst [vmem:[%s429 + $0x30] sm:$0xff] %v714
          %731 = vst [vmem:[%s429 + $0x38] sm:$0xff] %v715
          %732 = vst [vmem:[%s429 + $0x40] sm:$0xff] %v716
          %733 = vst [vmem:[%s429 + $0x48] sm:$0xff] %v717
          %734 = vst [vmem:[%s429 + $0x50] sm:$0xff] %v718
          %735 = vst [vmem:[%s429 + $0x58] sm:$0xff] %v719
          %736 = vst [vmem:[%s429 + $0x60] sm:$0xff] %v720
          %737 = vst [vmem:[%s429 + $0x68] sm:$0xff] %v721
          %738 = vst [vmem:[%s429 + $0x70] sm:$0xff] %v722
          %739 = vst [vmem:[%s429 + $0x78] sm:$0xff] %v723
          %v740 = vld [vmem:[%s423] sm:$0xff]
          %v741 = vld [vmem:[%s423 + $0x8] sm:$0xff]
          %v742 = vld [vmem:[%s423 + $0x10] sm:$0xff]
          %v743 = vld [vmem:[%s423 + $0x18] sm:$0xff]
          %v744 = vld [vmem:[%s423 + $0x20] sm:$0xff]
          %v745 = vld [vmem:[%s423 + $0x28] sm:$0xff]
          %v746 = vld [vmem:[%s423 + $0x30] sm:$0xff]
          %v747 = vld [vmem:[%s423 + $0x38] sm:$0xff]
          %v748 = vld [vmem:[%s423 + $0x40] sm:$0xff]
          %v749 = vld [vmem:[%s423 + $0x48] sm:$0xff]
          %v750 = vld [vmem:[%s423 + $0x50] sm:$0xff]
          %v751 = vld [vmem:[%s423 + $0x58] sm:$0xff]
          %v752 = vld [vmem:[%s423 + $0x60] sm:$0xff]
          %v753 = vld [vmem:[%s423 + $0x68] sm:$0xff]
          %v754 = vld [vmem:[%s423 + $0x70] sm:$0xff]
          %v755 = vld [vmem:[%s423 + $0x78] sm:$0xff]
          %757 = vset.pattern.permute.xlu0 0
          %758 = vperm.xlu0 %757, %v740
          %v759 = vpop.permute.xlu0 %758
          %762 = vset.pattern.permute.xlu0 0
          %763 = vperm.xlu0 %762, %v741
          %v764 = vpop.permute.xlu0 %763
          %767 = vset.pattern.permute.xlu0 0
          %768 = vperm.xlu0 %767, %v742
          %v769 = vpop.permute.xlu0 %768
          %772 = vset.pattern.permute.xlu0 0
          %773 = vperm.xlu0 %772, %v743
          %v774 = vpop.permute.xlu0 %773
          %777 = vset.pattern.permute.xlu0 0
          %778 = vperm.xlu0 %777, %v744
          %v779 = vpop.permute.xlu0 %778
          %782 = vset.pattern.permute.xlu0 0
          %783 = vperm.xlu0 %782, %v745
          %v784 = vpop.permute.xlu0 %783
          %787 = vset.pattern.permute.xlu0 0
          %788 = vperm.xlu0 %787, %v746
          %v789 = vpop.permute.xlu0 %788
          %792 = vset.pattern.permute.xlu0 0
          %793 = vperm.xlu0 %792, %v747
          %v794 = vpop.permute.xlu0 %793
          %797 = vset.pattern.permute.xlu0 0
          %798 = vperm.xlu0 %797, %v748
          %v799 = vpop.permute.xlu0 %798
          %802 = vset.pattern.permute.xlu0 0
          %803 = vperm.xlu0 %802, %v749
          %v804 = vpop.permute.xlu0 %803
          %807 = vset.pattern.permute.xlu0 0
          %808 = vperm.xlu0 %807, %v750
          %v809 = vpop.permute.xlu0 %808
          %812 = vset.pattern.permute.xlu0 0
          %813 = vperm.xlu0 %812, %v751
          %v814 = vpop.permute.xlu0 %813
          %817 = vset.pattern.permute.xlu0 0
          %818 = vperm.xlu0 %817, %v752
          %v819 = vpop.permute.xlu0 %818
          %822 = vset.pattern.permute.xlu0 0
          %823 = vperm.xlu0 %822, %v753
          %v824 = vpop.permute.xlu0 %823
          %827 = vset.pattern.permute.xlu0 0
          %828 = vperm.xlu0 %827, %v754
          %v829 = vpop.permute.xlu0 %828
          %832 = vset.pattern.permute.xlu0 0
          %833 = vperm.xlu0 %832, %v755
          %v834 = vpop.permute.xlu0 %833
          %v836 = vmul.f32 %v708, %v759
          %v837 = vmul.f32 %v709, %v764
          %v838 = vmul.f32 %v710, %v769
          %v839 = vmul.f32 %v711, %v774
          %v840 = vmul.f32 %v712, %v779
          %v841 = vmul.f32 %v713, %v784
          %v842 = vmul.f32 %v714, %v789
          %v843 = vmul.f32 %v715, %v794
          %v844 = vmul.f32 %v716, %v799
          %v845 = vmul.f32 %v717, %v804
          %v846 = vmul.f32 %v718, %v809
          %v847 = vmul.f32 %v719, %v814
          %v848 = vmul.f32 %v720, %v819
          %v849 = vmul.f32 %v721, %v824
          %v850 = vmul.f32 %v722, %v829
          %v851 = vmul.f32 %v723, %v834
          %v852 = vadd.f32 %v836, %v837
          %v853 = vadd.f32 %v852, %v838
          %v854 = vadd.f32 %v853, %v839
          %v855 = vadd.f32 %v854, %v840
          %v856 = vadd.f32 %v855, %v841
          %v857 = vadd.f32 %v856, %v842
          %v858 = vadd.f32 %v857, %v843
          %v859 = vadd.f32 %v858, %v844
          %v860 = vadd.f32 %v859, %v845
          %v861 = vadd.f32 %v860, %v846
          %v862 = vadd.f32 %v861, %v847
          %v863 = vadd.f32 %v862, %v848
          %v864 = vadd.f32 %v863, %v849
          %v865 = vadd.f32 %v864, %v850
          %v866 = vadd.f32 %v865, %v851
          %v867 = vrot.slane %v866, 4
          %v868 = vadd.f32 %v866, %v867
          %v869 = vrot.slane %v868, 2
          %v870 = vadd.f32 %v868, %v869
          %v871 = vrot.slane %v870, 1
          %v872 = vadd.f32 %v870, %v871
          %v873 = vmul.f32 %v836, %v708
          %v874 = vmul.f32 %v837, %v709
          %v875 = vmul.f32 %v838, %v710
          %v876 = vmul.f32 %v839, %v711
          %v877 = vmul.f32 %v840, %v712
          %v878 = vmul.f32 %v841, %v713
          %v879 = vmul.f32 %v842, %v714
          %v880 = vmul.f32 %v843, %v715
          %v881 = vmul.f32 %v844, %v716
          %v882 = vmul.f32 %v845, %v717
          %v883 = vmul.f32 %v846, %v718
          %v884 = vmul.f32 %v847, %v719
          %v885 = vmul.f32 %v848, %v720
          %v886 = vmul.f32 %v849, %v721
          %v887 = vmul.f32 %v850, %v722
          %v888 = vmul.f32 %v851, %v723
          %v889 = vadd.f32 %v873, %v874
          %v890 = vadd.f32 %v889, %v875
          %v891 = vadd.f32 %v890, %v876
          %v892 = vadd.f32 %v891, %v877
          %v893 = vadd.f32 %v892, %v878
          %v894 = vadd.f32 %v893, %v879
          %v895 = vadd.f32 %v894, %v880
          %v896 = vadd.f32 %v895, %v881
          %v897 = vadd.f32 %v896, %v882
          %v898 = vadd.f32 %v897, %v883
          %v899 = vadd.f32 %v898, %v884
          %v900 = vadd.f32 %v899, %v885
          %v901 = vadd.f32 %v900, %v886
          %v902 = vadd.f32 %v901, %v887
          %v903 = vadd.f32 %v902, %v888
          %v904 = vrot.slane %v903, 4
          %v905 = vadd.f32 %v903, %v904
          %v906 = vrot.slane %v905, 2
          %v907 = vadd.f32 %v905, %v906
          %v908 = vrot.slane %v907, 1
          %v909 = vadd.f32 %v907, %v908
          %910 = vst [vmem:[%s434] sm:$0xff] %v872
          %911 = vst [vmem:[%s438] sm:$0xff] %v909
        $region85: #{gcn_encoder.6} parent=72 // pred_fallthru
          _
        %s912 = smul.u32 16, %s22
        %p913 = scmp.lt.s32.totalorder %s912, 47
        %s914 = scalar_select %p913, %s912, 47
        %s915 = smul.addr %s914, 8
        %s916 = scalar_lea.vmem %s4, %s915
        %p917 = scmp.lt.s32.totalorder %s22, 2
        %s918 = scalar_select %p917, %s22, 2
        %s919 = smul.addr %s918, 8
        %s920 = scalar_lea.vmem %s5, %s919
        %p921 = scmp.lt.s32.totalorder %s22, 2
        %s922 = scalar_select %p921, %s22, 2
        %s923 = smul.addr %s922, 8
        %s924 = scalar_lea.vmem %s6, %s923
        // Predicated region
        $region86: #{gcn_encoder.6} parent=72 // pred_check
          %p925 = pneg %p149
        $region87: #{gcn_encoder.6} parent=72 // pred_check_branch
          %927 = sbr.rel (%p925) target = $region89
        $region88: #{gcn_encoder.6} parent=72 // pred_region
          %s928 = smul.u32 16, %s22
        $region89: #{gcn_encoder.6} parent=72 // pred_fallthru
          _
        // Predicated region
        $region90: #{gcn_encoder.6} parent=72 // pred_check
          %p929 = pneg %p175
        $region91: #{gcn_encoder.6} parent=72 // pred_check_branch
          %931 = sbr.rel (%p929) target = $region93
        $region92: #{gcn_encoder.6} parent=72 // pred_region
          _
        $region93: #{gcn_encoder.6} parent=72 // pred_fallthru
          _
        // Predicated region
        $region94: #{gcn_encoder.6} parent=72 // pred_check
          %p932 = pneg %p201
        $region95: #{gcn_encoder.6} parent=72 // pred_check_branch
          %934 = sbr.rel (%p932) target = $region97
        $region96: #{gcn_encoder.6} parent=72 // pred_region
          _
        $region97: #{gcn_encoder.6} parent=72 // pred_fallthru
          _
      $region73: #{gcn_encoder.6} parent=5 // pred_fallthru
        _
      %p935 = scmp.le.s32.totalorder 2, %s13
      // Predicated region
      $region98: #{gcn_encoder.6} parent=5 // pred_check
        %p936 = pneg %p935
      $region99: #{gcn_encoder.6} parent=5 // pred_check_branch
        %938 = sbr.rel (%p936) target = $region101
      $region100: #{gcn_encoder.6} parent=5 // pred_region
        %s939 = ssub.s32 %s13, 2
        // Predicated region
        $region102: #{gcn_encoder.6} parent=100 // pred_check
          %p940 = pneg %p155
        $region103: #{gcn_encoder.6} parent=100 // pred_check_branch
          %942 = sbr.rel (%p940) target = $region105
        $region104: #{gcn_encoder.6} parent=100 // pred_region
          %s943 = smul.u32 16, %s24
          %p944 = scmp.lt.s32.totalorder %s943, 47
          %s945 = scalar_select %p944, %s943, 47
          %s946 = smul.addr %s945, 8
          %s947 = scalar_lea.vmem %s4, %s946
        $region105: #{gcn_encoder.6} parent=100 // pred_fallthru
          _
        // Predicated region
        $region106: #{gcn_encoder.6} parent=100 // pred_check
          %p948 = pneg %p181
        $region107: #{gcn_encoder.6} parent=100 // pred_check_branch
          %950 = sbr.rel (%p948) target = $region109
        $region108: #{gcn_encoder.6} parent=100 // pred_region
          %p951 = scmp.lt.s32.totalorder %s24, 2
          %s952 = scalar_select %p951, %s24, 2
          %s953 = smul.addr %s952, 8
          %s954 = scalar_lea.vmem %s5, %s953
        $region109: #{gcn_encoder.6} parent=100 // pred_fallthru
          _
        // Predicated region
        $region110: #{gcn_encoder.6} parent=100 // pred_check
          %p955 = pneg %p207
        $region111: #{gcn_encoder.6} parent=100 // pred_check_branch
          %957 = sbr.rel (%p955) target = $region113
        $region112: #{gcn_encoder.6} parent=100 // pred_region
          %p958 = scmp.lt.s32.totalorder %s24, 2
          %s959 = scalar_select %p958, %s24, 2
          %s960 = smul.addr %s959, 8
          %s961 = scalar_lea.vmem %s6, %s960
        $region113: #{gcn_encoder.6} parent=100 // pred_fallthru
          _
      $region101: #{gcn_encoder.6} parent=5 // pred_fallthru
        _
    $region6: #{gcn_encoder.6} parent=1 // loop_footer
      %s17 = sadd.s32 1, %s13
    $region7: #{gcn_encoder.6} parent=1 // loop_footer_branch
      %12 = sbr.rel target = $region3
    $region8: #{gcn_encoder.6} parent=1 // loop_exit
      _

</llo_original>
